<compile_context>
chip_gen: v7x
topology: tpu7x:2x2x1
jax: 0.10.0
libtpu: 0.0.40
codegen_flags: <defaults>
</compile_context>

<pallas_src>
import jax
import jax.numpy as jnp
from jax.experimental import pallas as pl
from jax.experimental.pallas import tpu as pltpu


_LANES = 128          # vreg lane width; scores slab last dim
_LN_EPS = 1e-5        # torch.nn.LayerNorm default eps
_SMALL_PER_LAYER = 6  # bself, out_b, ln_gamma, ln_beta, fcx_b1, fcx_b2


# ----------------------------------------------------------------------------
# Fused Pallas kernel: embeddings -> n_layers x Block -> masked scores
# ----------------------------------------------------------------------------

def _fused_forward_kernel(
    xf_ref, tf_ref, a_t_ref, a_xct_ref, mbias_ref,
    fc_x_w_ref, fc_t_w_ref, w_msg_ref, out_w_ref, fcx_w1_ref, fcx_w2_ref,
    score_w_ref, small_ref,
    o_ref,
):
    f32 = jnp.float32
    bf16 = jnp.bfloat16

    small = small_ref[...]                     # packed (2+6L, d_hidden) biases
    fc_x_b = small[0:1, :]
    fc_t_b = small[1:2, :]

    # --- input embeddings: Linear -> ReLU (bf16 MXU operands, f32 accumulate)
    x = jnp.maximum(
        jnp.dot(xf_ref[...].astype(bf16), fc_x_w_ref[...],
                preferred_element_type=f32) + fc_x_b, 0.0)
    t = jnp.maximum(
        jnp.dot(tf_ref[...].astype(bf16), fc_t_w_ref[...],
                preferred_element_type=f32) + fc_t_b, 0.0)

    a_t = a_t_ref[...]      # (n_t, n_t) row-normalized adjacency (t -> t), f32
    a_xct = a_xct_ref[...]  # (n_t, n_x) row-normalized adjacency (x -> t), f32

    n_layers = w_msg_ref.shape[0]
    for l in range(n_layers):                  # static unroll (n_layers=2)
        r = 2 + _SMALL_PER_LAYER * l
        bself = small[r + 0:r + 1, :]
        out_b = small[r + 1:r + 2, :]
        ln_g = small[r + 2:r + 3, :]
        ln_b = small[r + 3:r + 4, :]
        fcx_b1 = small[r + 4:r + 5, :]
        fcx_b2 = small[r + 5:r + 6, :]

        # ----- Block.forward, t-branch --------------------------------------
        # mean-aggregate neighbours (SAGE-style conv stand-in for gnn_module);
        # kept in f32 so the degree-normalized mean is exact.
        agg_t = jnp.dot(a_t, t, preferred_element_type=f32)
        agg_x = jnp.dot(a_xct, x, preferred_element_type=f32)
        # gat_tt(t, e_t) + gat_xct((x, t), e_xct): all three matmuls fused into
        # one K = 3*d_hidden dot against the host-concatenated weight slab.
        lhs = jnp.concatenate([t, agg_t, agg_x], axis=-1).astype(bf16)
        msg = jnp.dot(lhs, w_msg_ref[l], preferred_element_type=f32) + bself
        t1 = jnp.maximum(t + msg, 0.0)         # t = (t + conv + conv).relu()

        # self.out = Linear -> ReLU -> LayerNorm, then residual
        h = jnp.maximum(
            jnp.dot(t1.astype(bf16), out_w_ref[l],
                    preferred_element_type=f32) + out_b, 0.0)
        mu = jnp.mean(h, axis=-1, keepdims=True)
        m2 = jnp.mean(h * h, axis=-1, keepdims=True)
        var = jnp.maximum(m2 - mu * mu, 0.0)   # one-pass LN statistics
        ln = (h - mu) * jax.lax.rsqrt(var + _LN_EPS) * ln_g + ln_b
        t = t1 + ln

        # ----- Block.forward, x-branch: x + fc_x(x) (uses the OLD x) --------
        hx = jnp.maximum(
            jnp.dot(x.astype(bf16), fcx_w1_ref[l],
                    preferred_element_type=f32) + fcx_b1, 0.0)
        x = x + jnp.dot(hx.astype(bf16), fcx_w2_ref[l],
                        preferred_element_type=f32) + fcx_b2

    # --- final scoring: lane-dense slab via zero-padded score weight; the
    # per-row additive bias carries both the score bias and the -inf mask.
    s = jnp.dot(t.astype(bf16), score_w_ref[...], preferred_element_type=f32)
    o_ref[...] = s + mbias_ref[...]


# ----------------------------------------------------------------------------
# Plain-JAX glue: parameter init, adjacency construction, forward wrapper
# ----------------------------------------------------------------------------

def _linear_init(key, fan_in, fan_out):
    kw, kb = jax.random.split(key)
    bound = 1.0 / jnp.sqrt(jnp.float32(fan_in))
    w = jax.random.uniform(kw, (fan_in, fan_out), jnp.float32, -bound, bound)
    b = jax.random.uniform(kb, (1, fan_out), jnp.float32, -bound, bound)
    return w, b


def init_params(key, d_node, d_route, d_hidden, n_layers):
    keys = jax.random.split(key, 4 + n_layers)
    params = {}
    params["fc_x_w"], params["fc_x_b"] = _linear_init(keys[0], d_node, d_hidden)
    params["fc_t_w"], params["fc_t_b"] = _linear_init(keys[1], d_route, d_hidden)
    params["fc_out_w"], params["fc_out_b"] = _linear_init(keys[2], d_hidden, 1)
    blocks = []
    for l in range(n_layers):
        bk = jax.random.split(keys[4 + l], 6)
        p = {}
        p["tt_wself"], p["tt_b"] = _linear_init(bk[0], d_hidden, d_hidden)
        p["tt_wnbr"], _ = _linear_init(bk[1], d_hidden, d_hidden)
        p["xct_wself"], p["xct_b"] = _linear_init(bk[2], d_hidden, d_hidden)
        p["xct_wnbr"], _ = _linear_init(bk[3], d_hidden, d_hidden)
        p["out_w"], p["out_b"] = _linear_init(bk[4], d_hidden, d_hidden)
        p["ln_gamma"] = jnp.ones((1, d_hidden), jnp.float32)
        p["ln_beta"] = jnp.zeros((1, d_hidden), jnp.float32)
        p["fcx_w1"], p["fcx_b1"] = _linear_init(bk[5], d_hidden, d_hidden)
        p["fcx_w2"], p["fcx_b2"] = _linear_init(
            jax.random.fold_in(bk[5], 1), d_hidden, d_hidden)
        blocks.append(p)
    params["blocks"] = blocks
    return params


def build_mean_adj(edge_index, n_dst, n_src):
    """Dense row-normalized aggregation matrix A[dst, src] (mean over neighbors)."""
    src, dst = edge_index[0], edge_index[1]
    a = jnp.zeros((n_dst, n_src), jnp.float32).at[dst, src].add(1.0)
    deg = jnp.clip(a.sum(axis=1, keepdims=True), 1.0, None)
    return a / deg


def _vmem_spec():
    # whole-array, single-buffered VMEM residency (no grid, no pipelining)
    return pl.BlockSpec(memory_space=pltpu.MemorySpace.VMEM)


def network_forward(params, x, t, e_t, e_xct, unique_mask):
    f32, bf16 = jnp.float32, jnp.bfloat16
    n_batch, n_nodes, d_node = x.shape
    _, max_n_routes, d_route = t.shape
    d_hidden = params["fc_x_w"].shape[1]
    n_x = n_batch * n_nodes
    n_t = n_batch * max_n_routes
    blocks = params["blocks"]
    n_layers = len(blocks)

    xf = x.reshape(n_x, d_node)
    tf = t.reshape(n_t, d_route)

    a_t = build_mean_adj(e_t, n_t, n_t)
    a_xct = build_mean_adj(e_xct, n_t, n_x)

    # Additive per-row bias: score bias for valid routes, -inf for masked ones.
    mask_flat = unique_mask.reshape(n_t, 1)
    mbias = jnp.where(mask_flat, params["fc_out_b"][0, 0],
                      -jnp.inf).astype(f32)

    # Fused message weights: [W_self(tt)+W_self(xct) ; W_nbr(tt) ; W_nbr(xct)]
    # along K -> one (3*d_hidden, d_hidden) matmul per layer (bf16 operands).
    w_msg = jnp.stack([
        jnp.concatenate([p["tt_wself"] + p["xct_wself"],
                         p["tt_wnbr"], p["xct_wnbr"]], axis=0)
        for p in blocks], axis=0).astype(bf16)
    out_w = jnp.stack([p["out_w"] for p in blocks], axis=0).astype(bf16)
    fcx_w1 = jnp.stack([p["fcx_w1"] for p in blocks], axis=0).astype(bf16)
    fcx_w2 = jnp.stack([p["fcx_w2"] for p in blocks], axis=0).astype(bf16)

    # Score weight zero-padded to a full lane width (only column 0 meaningful).
    score_w = jnp.zeros((d_hidden, _LANES), f32)
    score_w = score_w.at[:, 0].set(params["fc_out_w"][:, 0]).astype(bf16)

    # All tiny (1, d_hidden) params packed into ONE slab (f32, added post-acc).
    small_rows = [params["fc_x_b"], params["fc_t_b"]]
    for p in blocks:
        small_rows += [p["tt_b"] + p["xct_b"], p["out_b"], p["ln_gamma"],
                       p["ln_beta"], p["fcx_b1"], p["fcx_b2"]]
    small = jnp.concatenate(small_rows, axis=0)   # (2 + 6*n_layers, d_hidden)

    arrays = [
        xf, tf, a_t, a_xct, mbias,
        params["fc_x_w"].astype(bf16), params["fc_t_w"].astype(bf16),
        w_msg, out_w, fcx_w1, fcx_w2,
        score_w, small,
    ]

    # Scoped-VMEM limit sized to the real (single-buffered) footprint.
    footprint = sum(int(a.size) * a.dtype.itemsize for a in arrays)
    footprint += n_t * _LANES * 4                 # output slab
    vmem_limit = min(max(2 * footprint, 8 << 20), 100 << 20)

    slab = pl.pallas_call(
        _fused_forward_kernel,
        out_shape=jax.ShapeDtypeStruct((n_t, _LANES), jnp.float32),
        in_specs=[_vmem_spec() for _ in arrays],
        out_specs=_vmem_spec(),
        compiler_params=pltpu.CompilerParams(vmem_limit_bytes=vmem_limit),
    )(*arrays)

    # lane-dense slab -> (n_batch, max_n_routes) scores (lane 0 is the score)
    return slab[:, 0].reshape(n_batch, max_n_routes)


# ----------------------------------------------------------------------------
# Demo
# ----------------------------------------------------------------------------

if __name__ == "__main__":
    key = jax.random.PRNGKey(0)

    n_batch, n_nodes, d_node = 2, 16, 8
    max_n_routes, d_route = 8, 8
    d_hidden, n_layers = 128, 2          # d_hidden lane-aligned (128)
    n_x = n_batch * n_nodes
    n_t = n_batch * max_n_routes

    k_param, k_x, k_t, k_et, k_exct, k_mask = jax.random.split(key, 6)

    params = init_params(k_param, d_node, d_route, d_hidden, n_layers)

    x = jax.random.normal(k_x, (n_batch, n_nodes, d_node), jnp.float32)
    t = jax.random.normal(k_t, (n_batch, max_n_routes, d_route), jnp.float32)

    n_edges_t, n_edges_xct = 48, 64
    e_t = jax.random.randint(k_et, (2, n_edges_t), 0, n_t)                 # t -> t
    e_xct_src = jax.random.randint(k_exct, (n_edges_xct,), 0, n_x)         # x nodes
    e_xct_dst = jax.random.randint(jax.random.fold_in(k_exct, 1),
                                   (n_edges_xct,), 0, n_t)                 # t nodes
    e_xct = jnp.stack([e_xct_src, e_xct_dst], axis=0)

    unique_mask = jax.random.bernoulli(k_mask, 0.75, (n_batch, max_n_routes))
    unique_mask = unique_mask.at[:, 0].set(True)   # at least one valid route

    fwd = jax.jit(network_forward)
    scores = fwd(params, x, t, e_t, e_xct, unique_mask)
    scores = jax.block_until_ready(scores)

    assert scores.shape == (n_batch, max_n_routes)
    # masked-out routes must be -inf, valid routes finite
    if bool((~unique_mask).any()):
        assert bool(jnp.all(jnp.isneginf(scores[~unique_mask])))
    assert bool(jnp.all(jnp.isfinite(scores[unique_mask])))

    print("KERNEL_OK")
</pallas_src>

<mosaic_0001>
module attributes {stable_mosaic.version = 11 : i64} {
  func.func private @main(%arg0: i32) attributes {dimension_semantics = [#tpu.dimension_semantics<core_parallel>], iteration_bounds = array<i64: 2>, tpu.core_type = #tpu.core_type<sc_scalar_subcore>, window_params = []} {
    return
  }
}

module attributes {stable_mosaic.version = 11 : i64} {
  func.func private @main(%arg0: i32) attributes {dimension_semantics = [#tpu.dimension_semantics<core_parallel>], iteration_bounds = array<i64: 2>, tpu.core_type = #tpu.core_type<sc_scalar_subcore>, window_params = []} {
    return
  }
}

module attributes {stable_mosaic.version = 11 : i64} {
  func.func @_fused_forward_kernel(%arg0: memref<32x8xf32, #tpu.memory_space<vmem>>, %arg1: memref<16x8xf32, #tpu.memory_space<vmem>>, %arg2: memref<16x16xf32, #tpu.memory_space<vmem>>, %arg3: memref<16x32xf32, #tpu.memory_space<vmem>>, %arg4: memref<16x1xf32, #tpu.memory_space<vmem>>, %arg5: memref<8x128xbf16, #tpu.memory_space<vmem>>, %arg6: memref<8x128xbf16, #tpu.memory_space<vmem>>, %arg7: memref<2x384x128xbf16, #tpu.memory_space<vmem>>, %arg8: memref<2x128x128xbf16, #tpu.memory_space<vmem>>, %arg9: memref<2x128x128xbf16, #tpu.memory_space<vmem>>, %arg10: memref<2x128x128xbf16, #tpu.memory_space<vmem>>, %arg11: memref<128x128xbf16, #tpu.memory_space<vmem>>, %arg12: memref<14x128xf32, #tpu.memory_space<vmem>>, %arg13: memref<16x128xf32, #tpu.memory_space<vmem>>) attributes {dimension_semantics = [], scalar_prefetch = 0 : i64, scratch_operands = 0 : i64, tpu.core_type = #tpu.core_type<tc>} {
    %c0 = arith.constant 0 : index
    %c0_0 = arith.constant 0 : index
    %0 = vector.load %arg12[%c0, %c0_0] : memref<14x128xf32, #tpu.memory_space<vmem>>, vector<14x128xf32>
    %1 = vector.extract_strided_slice %0 {offsets = [0, 0], sizes = [1, 128], strides = [1, 1]} : vector<14x128xf32> to vector<1x128xf32>
    %2 = vector.extract_strided_slice %0 {offsets = [1, 0], sizes = [1, 128], strides = [1, 1]} : vector<14x128xf32> to vector<1x128xf32>
    %c0_1 = arith.constant 0 : index
    %c0_2 = arith.constant 0 : index
    %3 = vector.load %arg0[%c0_1, %c0_2] : memref<32x8xf32, #tpu.memory_space<vmem>>, vector<32x8xf32>
    %4 = arith.truncf %3 : vector<32x8xf32> to vector<32x8xbf16>
    %c0_3 = arith.constant 0 : index
    %c0_4 = arith.constant 0 : index
    %5 = vector.load %arg5[%c0_3, %c0_4] : memref<8x128xbf16, #tpu.memory_space<vmem>>, vector<8x128xbf16>
    %cst = arith.constant dense<0.000000e+00> : vector<32x128xf32>
    %6 = tpu.matmul %4, %5, %cst {dimension_numbers = #tpu.dot_dimension_numbers<[1], [0], [0], [1], [0, 0, 1, 1], [], []>} : vector<32x8xbf16>, vector<8x128xbf16>, vector<32x128xf32> -> vector<32x128xf32>
    %7 = vector.broadcast %1 : vector<1x128xf32> to vector<32x128xf32>
    %8 = arith.addf %6, %7 : vector<32x128xf32>
    %cst_5 = arith.constant 0.000000e+00 : f32
    %9 = vector.broadcast %cst_5 : f32 to vector<32x128xf32>
    %10 = arith.maximumf %8, %9 : vector<32x128xf32>
    %c0_6 = arith.constant 0 : index
    %c0_7 = arith.constant 0 : index
    %11 = vector.load %arg1[%c0_6, %c0_7] : memref<16x8xf32, #tpu.memory_space<vmem>>, vector<16x8xf32>
    %12 = arith.truncf %11 : vector<16x8xf32> to vector<16x8xbf16>
    %c0_8 = arith.constant 0 : index
    %c0_9 = arith.constant 0 : index
    %13 = vector.load %arg6[%c0_8, %c0_9] : memref<8x128xbf16, #tpu.memory_space<vmem>>, vector<8x128xbf16>
    %cst_10 = arith.constant dense<0.000000e+00> : vector<16x128xf32>
    %14 = tpu.matmul %12, %13, %cst_10 {dimension_numbers = #tpu.dot_dimension_numbers<[1], [0], [0], [1], [0, 0, 1, 1], [], []>} : vector<16x8xbf16>, vector<8x128xbf16>, vector<16x128xf32> -> vector<16x128xf32>
    %15 = vector.broadcast %2 : vector<1x128xf32> to vector<16x128xf32>
    %16 = arith.addf %14, %15 : vector<16x128xf32>
    %cst_11 = arith.constant 0.000000e+00 : f32
    %17 = vector.broadcast %cst_11 : f32 to vector<16x128xf32>
    %18 = arith.maximumf %16, %17 : vector<16x128xf32>
    %c0_12 = arith.constant 0 : index
    %c0_13 = arith.constant 0 : index
    %19 = vector.load %arg2[%c0_12, %c0_13] : memref<16x16xf32, #tpu.memory_space<vmem>>, vector<16x16xf32>
    %c0_14 = arith.constant 0 : index
    %c0_15 = arith.constant 0 : index
    %20 = vector.load %arg3[%c0_14, %c0_15] : memref<16x32xf32, #tpu.memory_space<vmem>>, vector<16x32xf32>
    %21 = vector.extract_strided_slice %0 {offsets = [2, 0], sizes = [1, 128], strides = [1, 1]} : vector<14x128xf32> to vector<1x128xf32>
    %22 = vector.extract_strided_slice %0 {offsets = [3, 0], sizes = [1, 128], strides = [1, 1]} : vector<14x128xf32> to vector<1x128xf32>
    %23 = vector.extract_strided_slice %0 {offsets = [4, 0], sizes = [1, 128], strides = [1, 1]} : vector<14x128xf32> to vector<1x128xf32>
    %24 = vector.extract_strided_slice %0 {offsets = [5, 0], sizes = [1, 128], strides = [1, 1]} : vector<14x128xf32> to vector<1x128xf32>
    %25 = vector.extract_strided_slice %0 {offsets = [6, 0], sizes = [1, 128], strides = [1, 1]} : vector<14x128xf32> to vector<1x128xf32>
    %26 = vector.extract_strided_slice %0 {offsets = [7, 0], sizes = [1, 128], strides = [1, 1]} : vector<14x128xf32> to vector<1x128xf32>
    %cst_16 = arith.constant dense<0.000000e+00> : vector<16x128xf32>
    %27 = tpu.matmul %19, %18, %cst_16 {dimension_numbers = #tpu.dot_dimension_numbers<[1], [0], [0], [1], [0, 0, 1, 1], [], []>} : vector<16x16xf32>, vector<16x128xf32>, vector<16x128xf32> -> vector<16x128xf32>
    %cst_17 = arith.constant dense<0.000000e+00> : vector<16x128xf32>
    %28 = tpu.matmul %20, %10, %cst_17 {dimension_numbers = #tpu.dot_dimension_numbers<[1], [0], [0], [1], [0, 0, 1, 1], [], []>} : vector<16x32xf32>, vector<32x128xf32>, vector<16x128xf32> -> vector<16x128xf32>
    %29 = tpu.concatenate %18, %27, %28 in 1 : vector<16x128xf32>, vector<16x128xf32>, vector<16x128xf32> -> vector<16x384xf32>
    %30 = arith.truncf %29 : vector<16x384xf32> to vector<16x384xbf16>
    %c0_18 = arith.constant 0 : index
    %c0_19 = arith.constant 0 : index
    %c0_20 = arith.constant 0 : index
    %31 = vector.load %arg7[%c0_18, %c0_19, %c0_20] : memref<2x384x128xbf16, #tpu.memory_space<vmem>>, vector<1x384x128xbf16>
    %32 = vector.shape_cast %31 : vector<1x384x128xbf16> to vector<384x128xbf16>
    %cst_21 = arith.constant dense<0.000000e+00> : vector<16x128xf32>
    %33 = tpu.matmul %30, %32, %cst_21 {dimension_numbers = #tpu.dot_dimension_numbers<[1], [0], [0], [1], [0, 0, 1, 1], [], []>} : vector<16x384xbf16>, vector<384x128xbf16>, vector<16x128xf32> -> vector<16x128xf32>
    %34 = vector.broadcast %21 : vector<1x128xf32> to vector<16x128xf32>
    %35 = arith.addf %33, %34 : vector<16x128xf32>
    %36 = arith.addf %18, %35 : vector<16x128xf32>
    %cst_22 = arith.constant 0.000000e+00 : f32
    %37 = vector.broadcast %cst_22 : f32 to vector<16x128xf32>
    %38 = arith.maximumf %36, %37 : vector<16x128xf32>
    %39 = arith.truncf %38 : vector<16x128xf32> to vector<16x128xbf16>
    %c0_23 = arith.constant 0 : index
    %c0_24 = arith.constant 0 : index
    %c0_25 = arith.constant 0 : index
    %40 = vector.load %arg8[%c0_23, %c0_24, %c0_25] : memref<2x128x128xbf16, #tpu.memory_space<vmem>>, vector<1x128x128xbf16>
    %41 = vector.shape_cast %40 : vector<1x128x128xbf16> to vector<128x128xbf16>
    %cst_26 = arith.constant dense<0.000000e+00> : vector<16x128xf32>
    %42 = tpu.matmul %39, %41, %cst_26 {dimension_numbers = #tpu.dot_dimension_numbers<[1], [0], [0], [1], [0, 0, 1, 1], [], []>} : vector<16x128xbf16>, vector<128x128xbf16>, vector<16x128xf32> -> vector<16x128xf32>
    %43 = vector.broadcast %22 : vector<1x128xf32> to vector<16x128xf32>
    %44 = arith.addf %42, %43 : vector<16x128xf32>
    %cst_27 = arith.constant 0.000000e+00 : f32
    %45 = vector.broadcast %cst_27 : f32 to vector<16x128xf32>
    %46 = arith.maximumf %44, %45 : vector<16x128xf32>
    %cst_28 = arith.constant dense<0.000000e+00> : vector<16xf32>
    %47 = vector.multi_reduction <add>, %46, %cst_28 [1] : vector<16x128xf32> to vector<16xf32>
    %48 = vector.shape_cast %47 : vector<16xf32> to vector<16x1xf32>
    %cst_29 = arith.constant 1.280000e+02 : f32
    %49 = vector.broadcast %cst_29 : f32 to vector<16x1xf32>
    %50 = arith.divf %48, %49 : vector<16x1xf32>
    %51 = arith.mulf %46, %46 : vector<16x128xf32>
    %cst_30 = arith.constant dense<0.000000e+00> : vector<16xf32>
    %52 = vector.multi_reduction <add>, %51, %cst_30 [1] : vector<16x128xf32> to vector<16xf32>
    %53 = vector.shape_cast %52 : vector<16xf32> to vector<16x1xf32>
    %cst_31 = arith.constant 1.280000e+02 : f32
    %54 = vector.broadcast %cst_31 : f32 to vector<16x1xf32>
    %55 = arith.divf %53, %54 : vector<16x1xf32>
    %56 = arith.mulf %50, %50 : vector<16x1xf32>
    %57 = arith.subf %55, %56 : vector<16x1xf32>
    %cst_32 = arith.constant 0.000000e+00 : f32
    %58 = vector.broadcast %cst_32 : f32 to vector<16x1xf32>
    %59 = arith.maximumf %57, %58 : vector<16x1xf32>
    %60 = vector.broadcast %50 : vector<16x1xf32> to vector<16x128xf32>
    %61 = arith.subf %46, %60 : vector<16x128xf32>
    %cst_33 = arith.constant 9.99999974E-6 : f32
    %62 = vector.broadcast %cst_33 : f32 to vector<16x1xf32>
    %63 = arith.addf %59, %62 : vector<16x1xf32>
    %64 = math.rsqrt %63 : vector<16x1xf32>
    %65 = vector.broadcast %64 : vector<16x1xf32> to vector<16x128xf32>
    %66 = arith.mulf %61, %65 : vector<16x128xf32>
    %67 = vector.broadcast %23 : vector<1x128xf32> to vector<16x128xf32>
    %68 = arith.mulf %66, %67 : vector<16x128xf32>
    %69 = vector.broadcast %24 : vector<1x128xf32> to vector<16x128xf32>
    %70 = arith.addf %68, %69 : vector<16x128xf32>
    %71 = arith.addf %38, %70 : vector<16x128xf32>
    %72 = arith.truncf %10 : vector<32x128xf32> to vector<32x128xbf16>
    %c0_34 = arith.constant 0 : index
    %c0_35 = arith.constant 0 : index
    %c0_36 = arith.constant 0 : index
    %73 = vector.load %arg9[%c0_34, %c0_35, %c0_36] : memref<2x128x128xbf16, #tpu.memory_space<vmem>>, vector<1x128x128xbf16>
    %74 = vector.shape_cast %73 : vector<1x128x128xbf16> to vector<128x128xbf16>
    %cst_37 = arith.constant dense<0.000000e+00> : vector<32x128xf32>
    %75 = tpu.matmul %72, %74, %cst_37 {dimension_numbers = #tpu.dot_dimension_numbers<[1], [0], [0], [1], [0, 0, 1, 1], [], []>} : vector<32x128xbf16>, vector<128x128xbf16>, vector<32x128xf32> -> vector<32x128xf32>
    %76 = vector.broadcast %25 : vector<1x128xf32> to vector<32x128xf32>
    %77 = arith.addf %75, %76 : vector<32x128xf32>
    %cst_38 = arith.constant 0.000000e+00 : f32
    %78 = vector.broadcast %cst_38 : f32 to vector<32x128xf32>
    %79 = arith.maximumf %77, %78 : vector<32x128xf32>
    %80 = arith.truncf %79 : vector<32x128xf32> to vector<32x128xbf16>
    %c0_39 = arith.constant 0 : index
    %c0_40 = arith.constant 0 : index
    %c0_41 = arith.constant 0 : index
    %81 = vector.load %arg10[%c0_39, %c0_40, %c0_41] : memref<2x128x128xbf16, #tpu.memory_space<vmem>>, vector<1x128x128xbf16>
    %82 = vector.shape_cast %81 : vector<1x128x128xbf16> to vector<128x128xbf16>
    %cst_42 = arith.constant dense<0.000000e+00> : vector<32x128xf32>
    %83 = tpu.matmul %80, %82, %cst_42 {dimension_numbers = #tpu.dot_dimension_numbers<[1], [0], [0], [1], [0, 0, 1, 1], [], []>} : vector<32x128xbf16>, vector<128x128xbf16>, vector<32x128xf32> -> vector<32x128xf32>
    %84 = arith.addf %10, %83 : vector<32x128xf32>
    %85 = vector.broadcast %26 : vector<1x128xf32> to vector<32x128xf32>
    %86 = arith.addf %84, %85 : vector<32x128xf32>
    %87 = vector.extract_strided_slice %0 {offsets = [8, 0], sizes = [1, 128], strides = [1, 1]} : vector<14x128xf32> to vector<1x128xf32>
    %88 = vector.extract_strided_slice %0 {offsets = [9, 0], sizes = [1, 128], strides = [1, 1]} : vector<14x128xf32> to vector<1x128xf32>
    %89 = vector.extract_strided_slice %0 {offsets = [10, 0], sizes = [1, 128], strides = [1, 1]} : vector<14x128xf32> to vector<1x128xf32>
    %90 = vector.extract_strided_slice %0 {offsets = [11, 0], sizes = [1, 128], strides = [1, 1]} : vector<14x128xf32> to vector<1x128xf32>
    %cst_43 = arith.constant dense<0.000000e+00> : vector<16x128xf32>
    %91 = tpu.matmul %19, %71, %cst_43 {dimension_numbers = #tpu.dot_dimension_numbers<[1], [0], [0], [1], [0, 0, 1, 1], [], []>} : vector<16x16xf32>, vector<16x128xf32>, vector<16x128xf32> -> vector<16x128xf32>
    %cst_44 = arith.constant dense<0.000000e+00> : vector<16x128xf32>
    %92 = tpu.matmul %20, %86, %cst_44 {dimension_numbers = #tpu.dot_dimension_numbers<[1], [0], [0], [1], [0, 0, 1, 1], [], []>} : vector<16x32xf32>, vector<32x128xf32>, vector<16x128xf32> -> vector<16x128xf32>
    %93 = tpu.concatenate %71, %91, %92 in 1 : vector<16x128xf32>, vector<16x128xf32>, vector<16x128xf32> -> vector<16x384xf32>
    %94 = arith.truncf %93 : vector<16x384xf32> to vector<16x384xbf16>
    %c1 = arith.constant 1 : index
    %c0_45 = arith.constant 0 : index
    %c0_46 = arith.constant 0 : index
    %95 = vector.load %arg7[%c1, %c0_45, %c0_46] : memref<2x384x128xbf16, #tpu.memory_space<vmem>>, vector<1x384x128xbf16>
    %96 = vector.shape_cast %95 : vector<1x384x128xbf16> to vector<384x128xbf16>
    %cst_47 = arith.constant dense<0.000000e+00> : vector<16x128xf32>
    %97 = tpu.matmul %94, %96, %cst_47 {dimension_numbers = #tpu.dot_dimension_numbers<[1], [0], [0], [1], [0, 0, 1, 1], [], []>} : vector<16x384xbf16>, vector<384x128xbf16>, vector<16x128xf32> -> vector<16x128xf32>
    %98 = vector.broadcast %87 : vector<1x128xf32> to vector<16x128xf32>
    %99 = arith.addf %97, %98 : vector<16x128xf32>
    %100 = arith.addf %71, %99 : vector<16x128xf32>
    %cst_48 = arith.constant 0.000000e+00 : f32
    %101 = vector.broadcast %cst_48 : f32 to vector<16x128xf32>
    %102 = arith.maximumf %100, %101 : vector<16x128xf32>
    %103 = arith.truncf %102 : vector<16x128xf32> to vector<16x128xbf16>
    %c1_49 = arith.constant 1 : index
    %c0_50 = arith.constant 0 : index
    %c0_51 = arith.constant 0 : index
    %104 = vector.load %arg8[%c1_49, %c0_50, %c0_51] : memref<2x128x128xbf16, #tpu.memory_space<vmem>>, vector<1x128x128xbf16>
    %105 = vector.shape_cast %104 : vector<1x128x128xbf16> to vector<128x128xbf16>
    %cst_52 = arith.constant dense<0.000000e+00> : vector<16x128xf32>
    %106 = tpu.matmul %103, %105, %cst_52 {dimension_numbers = #tpu.dot_dimension_numbers<[1], [0], [0], [1], [0, 0, 1, 1], [], []>} : vector<16x128xbf16>, vector<128x128xbf16>, vector<16x128xf32> -> vector<16x128xf32>
    %107 = vector.broadcast %88 : vector<1x128xf32> to vector<16x128xf32>
    %108 = arith.addf %106, %107 : vector<16x128xf32>
    %cst_53 = arith.constant 0.000000e+00 : f32
    %109 = vector.broadcast %cst_53 : f32 to vector<16x128xf32>
    %110 = arith.maximumf %108, %109 : vector<16x128xf32>
    %cst_54 = arith.constant dense<0.000000e+00> : vector<16xf32>
    %111 = vector.multi_reduction <add>, %110, %cst_54 [1] : vector<16x128xf32> to vector<16xf32>
    %112 = vector.shape_cast %111 : vector<16xf32> to vector<16x1xf32>
    %cst_55 = arith.constant 1.280000e+02 : f32
    %113 = vector.broadcast %cst_55 : f32 to vector<16x1xf32>
    %114 = arith.divf %112, %113 : vector<16x1xf32>
    %115 = arith.mulf %110, %110 : vector<16x128xf32>
    %cst_56 = arith.constant dense<0.000000e+00> : vector<16xf32>
    %116 = vector.multi_reduction <add>, %115, %cst_56 [1] : vector<16x128xf32> to vector<16xf32>
    %117 = vector.shape_cast %116 : vector<16xf32> to vector<16x1xf32>
    %cst_57 = arith.constant 1.280000e+02 : f32
    %118 = vector.broadcast %cst_57 : f32 to vector<16x1xf32>
    %119 = arith.divf %117, %118 : vector<16x1xf32>
    %120 = arith.mulf %114, %114 : vector<16x1xf32>
    %121 = arith.subf %119, %120 : vector<16x1xf32>
    %cst_58 = arith.constant 0.000000e+00 : f32
    %122 = vector.broadcast %cst_58 : f32 to vector<16x1xf32>
    %123 = arith.maximumf %121, %122 : vector<16x1xf32>
    %124 = vector.broadcast %114 : vector<16x1xf32> to vector<16x128xf32>
    %125 = arith.subf %110, %124 : vector<16x128xf32>
    %cst_59 = arith.constant 9.99999974E-6 : f32
    %126 = vector.broadcast %cst_59 : f32 to vector<16x1xf32>
    %127 = arith.addf %123, %126 : vector<16x1xf32>
    %128 = math.rsqrt %127 : vector<16x1xf32>
    %129 = vector.broadcast %128 : vector<16x1xf32> to vector<16x128xf32>
    %130 = arith.mulf %125, %129 : vector<16x128xf32>
    %131 = vector.broadcast %89 : vector<1x128xf32> to vector<16x128xf32>
    %132 = arith.mulf %130, %131 : vector<16x128xf32>
    %133 = vector.broadcast %90 : vector<1x128xf32> to vector<16x128xf32>
    %134 = arith.addf %132, %133 : vector<16x128xf32>
    %135 = arith.addf %102, %134 : vector<16x128xf32>
    %136 = arith.truncf %135 : vector<16x128xf32> to vector<16x128xbf16>
    %c0_60 = arith.constant 0 : index
    %c0_61 = arith.constant 0 : index
    %137 = vector.load %arg11[%c0_60, %c0_61] : memref<128x128xbf16, #tpu.memory_space<vmem>>, vector<128x128xbf16>
    %cst_62 = arith.constant dense<0.000000e+00> : vector<16x128xf32>
    %138 = tpu.matmul %136, %137, %cst_62 {dimension_numbers = #tpu.dot_dimension_numbers<[1], [0], [0], [1], [0, 0, 1, 1], [], []>} : vector<16x128xbf16>, vector<128x128xbf16>, vector<16x128xf32> -> vector<16x128xf32>
    %c0_63 = arith.constant 0 : index
    %c0_64 = arith.constant 0 : index
    %139 = vector.load %arg4[%c0_63, %c0_64] : memref<16x1xf32, #tpu.memory_space<vmem>>, vector<16x1xf32>
    %140 = vector.broadcast %139 : vector<16x1xf32> to vector<16x128xf32>
    %141 = arith.addf %138, %140 : vector<16x128xf32>
    %c0_65 = arith.constant 0 : index
    %c0_66 = arith.constant 0 : index
    %142 = vector.load %arg13[%c0_65, %c0_66] : memref<16x128xf32, #tpu.memory_space<vmem>>, vector<16x128xf32>
    tpu.vector_store %arg13[%c0_65, %c0_66], %141 {strides = array<i32>} : memref<16x128xf32, #tpu.memory_space<vmem>>, vector<16x128xf32>,
    return
  }
}

</mosaic_0001>

<llo_original>
// kernel: squeeze.13
$region0: #{squeeze.13}
  %s0 = inlined_call_operand.vmem [shape: f32[16], index: 0, kind: input, shape index: {}]
  %s1 = inlined_call_operand.hbm [shape: f32[2,8], index: 1, kind: output, shape index: {}]
  $region1: #{squeeze.13} parent=0
    #allocation0 [shape = 'u8[1024]{0}', space=vmem, size = 0x400, scoped, tag = 'operand span for operand 1']
    #allocation1 [shape = 's32[1]{0}', space=sflag, size = 0x4, scoped, tag = 'scoped memory for squeeze.13']
    #allocation2 [shape = 'u8[4096]{0}', space=vmem, size = 0x1000, scoped, tag = 'scoped mem for output reshape']
    #allocation3 [shape = 'u8[4096]{0}', space=vmem, size = 0x1000, scoped, tag = 'scoped mem for input reshape']
    %2 = vsyncpa [#allocation1], 0
    %s4 = sshllo.u32 0, 1
    %v5 = vld [vmem:[%s0] sm:%s4]
    %6 = vst [vmem:[#allocation3] sm:%s4] %v5
    %v7 = vld [vmem:[#allocation3] sm:$0x1]
    %vm8 = vcmask 64512
    %9 = vst.msk [vmem:[#allocation2] sm:$0x1] %vm8, %v7
    %v10 = vld [vmem:[#allocation3] sm:$0x1]
    %11 = vrot.lane.b32.xlu0 %v10, 120
    %v12 = vpop.permute.xlu0 %11
    %vm13 = vcmask 64512
    %s14 = scalar_lea.vmem [#allocation2], 1
    %15 = vst.msk [vmem:[%s14] sm:$0x1] %vm13, %v12
    %s17 = sshllo.u32 0, 2
    %v19 = vld [vmem:[#allocation2] sm:%s17]
    %s20 = sshllo.u32 0, 2
    %21 = vst [vmem:[#allocation0] sm:%s20] %v19
    %s23 = ssub.s32 32, 32
    %24 = vsyncadd [#allocation1], %s23
    %s26 = sshll.u32 [#allocation0], 4
    %s27 = int_to_ptr.vmem [resolvable:$true] %s26
    %29 = dma.vmem_to_hbm [thread:$0]  %s27, 32, %s1, [#allocation1]
    %30 = dma.done [#allocation1], 32
    %31 = vsyncpa [#allocation1], 1

// kernel: network_forward.1
$region0: #{network_forward.1}
  #allocation0 [shape = 'u32[]', space=smem, size = 0x4, offset = 0x4, fixed_abs, tag = 'smem constant byte address 0x4 - core index']
  #allocation1 [shape = 'u32[144,128]{1,0:T(1,128)}', space=vmem, size = 0x12000, scoped, tag = 'internal scratch']
  %s0 = inlined_call_operand.vmem [shape: f32[32,8], index: 0, kind: input, shape index: {}]
  %s1 = inlined_call_operand.vmem [shape: f32[16,8], index: 1, kind: input, shape index: {}]
  %s2 = inlined_call_operand.vmem [shape: f32[16,16], index: 2, kind: input, shape index: {}]
  %s3 = inlined_call_operand.vmem [shape: f32[16,32], index: 3, kind: input, shape index: {}]
  %s4 = inlined_call_operand.vmem [shape: f32[16,1], index: 4, kind: input, shape index: {}]
  %s5 = inlined_call_operand.vmem [shape: bf16[8,128], index: 5, kind: input, shape index: {}]
  %s6 = inlined_call_operand.vmem [shape: bf16[8,128], index: 6, kind: input, shape index: {}]
  %s7 = inlined_call_operand.vmem [shape: bf16[2,384,128], index: 7, kind: input, shape index: {}]
  %s8 = inlined_call_operand.vmem [shape: bf16[2,128,128], index: 8, kind: input, shape index: {}]
  %s9 = inlined_call_operand.vmem [shape: bf16[2,128,128], index: 9, kind: input, shape index: {}]
  %s10 = inlined_call_operand.vmem [shape: bf16[2,128,128], index: 10, kind: input, shape index: {}]
  %s11 = inlined_call_operand.vmem [shape: bf16[128,128], index: 11, kind: input, shape index: {}]
  %s12 = inlined_call_operand.vmem [shape: f32[14,128], index: 12, kind: input, shape index: {}]
  %s13 = inlined_call_operand.vmem [shape: f32[16,128], index: 13, kind: output, shape index: {}]
  %s14 = sld [smem:[#allocation0]]
  $region62: #{network_forward.1} parent=0
    _
  %s16 = ssub.s32 1, %s14
  %s17 = scalar_select 0, %s16, %s14
  // Predicated region
  $region2: #{network_forward.1} parent=0 // pred_check
    _
  $region3: #{network_forward.1} parent=0 // pred_check_branch
    %19 = sbr.rel (0) target = $region5
  $region4: #{network_forward.1} parent=0 // pred_region
    _
  $region5: #{network_forward.1} parent=0 // pred_fallthru
    _
  // Predicated region
  $region6: #{network_forward.1} parent=0 // pred_check
    _
  $region7: #{network_forward.1} parent=0 // pred_check_branch
    %21 = sbr.rel (0) target = $region9
  $region8: #{network_forward.1} parent=0 // pred_region
    _
  $region9: #{network_forward.1} parent=0 // pred_fallthru
    _
  // Predicated region
  $region10: #{network_forward.1} parent=0 // pred_check
    _
  $region11: #{network_forward.1} parent=0 // pred_check_branch
    %23 = sbr.rel (0) target = $region13
  $region12: #{network_forward.1} parent=0 // pred_region
    _
  $region13: #{network_forward.1} parent=0 // pred_fallthru
    _
  // Predicated region
  $region14: #{network_forward.1} parent=0 // pred_check
    _
  $region15: #{network_forward.1} parent=0 // pred_check_branch
    %25 = sbr.rel (0) target = $region17
  $region16: #{network_forward.1} parent=0 // pred_region
    _
  $region17: #{network_forward.1} parent=0 // pred_fallthru
    _
  // Predicated region
  $region18: #{network_forward.1} parent=0 // pred_check
    _
  $region19: #{network_forward.1} parent=0 // pred_check_branch
    %27 = sbr.rel (0) target = $region21
  $region20: #{network_forward.1} parent=0 // pred_region
    _
  $region21: #{network_forward.1} parent=0 // pred_fallthru
    _
  // Predicated region
  $region22: #{network_forward.1} parent=0 // pred_check
    _
  $region23: #{network_forward.1} parent=0 // pred_check_branch
    %29 = sbr.rel (0) target = $region25
  $region24: #{network_forward.1} parent=0 // pred_region
    _
  $region25: #{network_forward.1} parent=0 // pred_fallthru
    _
  // Predicated region
  $region26: #{network_forward.1} parent=0 // pred_check
    _
  $region27: #{network_forward.1} parent=0 // pred_check_branch
    %31 = sbr.rel (0) target = $region29
  $region28: #{network_forward.1} parent=0 // pred_region
    _
  $region29: #{network_forward.1} parent=0 // pred_fallthru
    _
  // Predicated region
  $region30: #{network_forward.1} parent=0 // pred_check
    _
  $region31: #{network_forward.1} parent=0 // pred_check_branch
    %33 = sbr.rel (0) target = $region33
  $region32: #{network_forward.1} parent=0 // pred_region
    _
  $region33: #{network_forward.1} parent=0 // pred_fallthru
    _
  // Predicated region
  $region34: #{network_forward.1} parent=0 // pred_check
    _
  $region35: #{network_forward.1} parent=0 // pred_check_branch
    %35 = sbr.rel (0) target = $region37
  $region36: #{network_forward.1} parent=0 // pred_region
    _
  $region37: #{network_forward.1} parent=0 // pred_fallthru
    _
  // Predicated region
  $region38: #{network_forward.1} parent=0 // pred_check
    _
  $region39: #{network_forward.1} parent=0 // pred_check_branch
    %37 = sbr.rel (0) target = $region41
  $region40: #{network_forward.1} parent=0 // pred_region
    _
  $region41: #{network_forward.1} parent=0 // pred_fallthru
    _
  // Predicated region
  $region42: #{network_forward.1} parent=0 // pred_check
    _
  $region43: #{network_forward.1} parent=0 // pred_check_branch
    %39 = sbr.rel (0) target = $region45
  $region44: #{network_forward.1} parent=0 // pred_region
    _
  $region45: #{network_forward.1} parent=0 // pred_fallthru
    _
  // Predicated region
  $region46: #{network_forward.1} parent=0 // pred_check
    _
  $region47: #{network_forward.1} parent=0 // pred_check_branch
    %41 = sbr.rel (0) target = $region49
  $region48: #{network_forward.1} parent=0 // pred_region
    _
  $region49: #{network_forward.1} parent=0 // pred_fallthru
    _
  // Predicated region
  $region50: #{network_forward.1} parent=0 // pred_check
    _
  $region51: #{network_forward.1} parent=0 // pred_check_branch
    %43 = sbr.rel (0) target = $region53
  $region52: #{network_forward.1} parent=0 // pred_region
    _
  $region53: #{network_forward.1} parent=0 // pred_fallthru
    _
  %v45 = vld [vmem:[%s12] sm:$0xff]
  %v46 = vld [vmem:[%s12 + $0x8] sm:$0x3f]
  %v47 = vld [vmem:[%s0] sm:$0xff]
  %v48 = vld [vmem:[%s0 + $0x8] sm:$0xff]
  %v49 = vld [vmem:[%s0 + $0x10] sm:$0xff]
  %v50 = vld [vmem:[%s0 + $0x18] sm:$0xff]
  %v51 = vpack.c.bf16 %v48, %v47
  %v52 = vpack.c.bf16 %v50, %v49
  %v53 = vld [vmem:[%s5] sm:$0xf]
  %v54 = vlaneseq
  %v55 = vshrl.u32 %v54, 7
  %v56 = vsub.s32 0, %v55
  %v57 = vrot.slane %v45, %v56
  %vm58 = vcmask 64512
  %v60 = vsel %vm58, %v51, 0
  %v63 = vsel %vm58, %v52, 0
  %vm65 = vcmask 1043456
  %v67 = vsel %vm65, %v53, 0
  %69 = vmatprep.subr.bf16.mxu0 0
  %70 = vmatpush1.bf16.msra.mxu0 %v67
  %71 = vmatprep.subr.bf16.mxu0 0
  %72 = vmatpush1.bf16.msra.mxu0 0
  %73 = vmatprep.subr.bf16.mxu0 0
  %74 = vmatpush1.bf16.msra.mxu0 0
  %75 = vmatprep.subr.bf16.mxu0 0
  %76 = vmatpush1.bf16.msra.mxu0 0
  %77 = vmatprep.subr.bf16.mxu0 0
  %78 = vmatpush1.bf16.msra.mxu0 0
  %79 = vmatprep.subr.bf16.mxu0 0
  %80 = vmatpush1.bf16.msra.mxu0 0
  %81 = vmatprep.subr.bf16.mxu0 0
  %82 = vmatpush1.bf16.msra.mxu0 0
  %83 = vmatprep.subr.bf16.mxu0 0
  %84 = vmatpush1.bf16.msra.mxu0 0
  %85 = vmatprep.subr.bf16.mxu0 0
  %86 = vmatpush1.bf16.msra.mxu0 0
  %87 = vmatprep.subr.bf16.mxu0 0
  %88 = vmatpush1.bf16.msra.mxu0 0
  %89 = vmatprep.subr.bf16.mxu0 0
  %90 = vmatpush1.bf16.msra.mxu0 0
  %91 = vmatprep.subr.bf16.mxu0 0
  %92 = vmatpush1.bf16.msra.mxu0 0
  %93 = vmatprep.subr.bf16.mxu0 0
  %94 = vmatpush1.bf16.msra.mxu0 0
  %95 = vmatprep.subr.bf16.mxu0 0
  %96 = vmatpush1.bf16.msra.mxu0 0
  %97 = vmatprep.subr.bf16.mxu0 0
  %98 = vmatpush1.bf16.msra.mxu0 0
  %99 = vmatprep.subr.bf16.mxu0 0
  %100 = vmatpush1.bf16.msra.mxu0 0
  %101 = vmatprep.mubr.bf16.mxu0 0
  %102 = vmatmul.mubr.bf16.gmra.mrb[0].mxu0 %v60
  %v103 = vpop.f32.mrb[0].mxu0
  %v104 = vadd.f32 %v57, %v103
  %v105 = vpop.f32.mrb[0].mxu0
  %v106 = vpop.f32.mrb[0].mxu0
  %v107 = vadd.f32 %v57, %v106
  %v108 = vpop.f32.mrb[0].mxu0
  %109 = vmatprep.mubr.bf16.mxu0 0
  %110 = vmatmul.mubr.bf16.gmra.mrb[0].mxu0 %v63
  %v111 = vpop.f32.mrb[0].mxu0
  %v112 = vadd.f32 %v57, %v111
  %v113 = vpop.f32.mrb[0].mxu0
  %v114 = vpop.f32.mrb[0].mxu0
  %v115 = vadd.f32 %v57, %v114
  %v116 = vpop.f32.mrb[0].mxu0
  %117 = vdwg.mxu0
  %v118 = vmax.f32 %v104, 0.0
  %v119 = vmax.f32 %v107, 0.0
  %v120 = vmax.f32 %v112, 0.0
  %v121 = vmax.f32 %v115, 0.0
  %v122 = vld [vmem:[%s1] sm:$0xff]
  %v123 = vld [vmem:[%s1 + $0x8] sm:$0xff]
  %v124 = vpack.c.bf16 %v123, %v122
  %v125 = vld [vmem:[%s6] sm:$0xf]
  %v126 = vlaneseq
  %v127 = vshrl.u32 %v126, 7
  %v128 = vsub.s32 1, %v127
  %v129 = vrot.slane %v45, %v128
  %v131 = vsel %vm58, %v124, 0
  %v134 = vsel %vm65, %v125, 0
  %136 = vmatprep.subr.bf16.mxu0 0
  %137 = vmatpush1.bf16.msra.mxu0 %v134
  %138 = vmatprep.subr.bf16.mxu0 0
  %139 = vmatpush1.bf16.msra.mxu0 0
  %140 = vmatprep.subr.bf16.mxu0 0
  %141 = vmatpush1.bf16.msra.mxu0 0
  %142 = vmatprep.subr.bf16.mxu0 0
  %143 = vmatpush1.bf16.msra.mxu0 0
  %144 = vmatprep.subr.bf16.mxu0 0
  %145 = vmatpush1.bf16.msra.mxu0 0
  %146 = vmatprep.subr.bf16.mxu0 0
  %147 = vmatpush1.bf16.msra.mxu0 0
  %148 = vmatprep.subr.bf16.mxu0 0
  %149 = vmatpush1.bf16.msra.mxu0 0
  %150 = vmatprep.subr.bf16.mxu0 0
  %151 = vmatpush1.bf16.msra.mxu0 0
  %152 = vmatprep.subr.bf16.mxu0 0
  %153 = vmatpush1.bf16.msra.mxu0 0
  %154 = vmatprep.subr.bf16.mxu0 0
  %155 = vmatpush1.bf16.msra.mxu0 0
  %156 = vmatprep.subr.bf16.mxu0 0
  %157 = vmatpush1.bf16.msra.mxu0 0
  %158 = vmatprep.subr.bf16.mxu0 0
  %159 = vmatpush1.bf16.msra.mxu0 0
  %160 = vmatprep.subr.bf16.mxu0 0
  %161 = vmatpush1.bf16.msra.mxu0 0
  %162 = vmatprep.subr.bf16.mxu0 0
  %163 = vmatpush1.bf16.msra.mxu0 0
  %164 = vmatprep.subr.bf16.mxu0 0
  %165 = vmatpush1.bf16.msra.mxu0 0
  %166 = vmatprep.subr.bf16.mxu0 0
  %167 = vmatpush1.bf16.msra.mxu0 0
  %168 = vmatprep.mubr.bf16.mxu0 0
  %169 = vmatmul.mubr.bf16.gmra.mrb[0].mxu0 %v131
  %v170 = vpop.f32.mrb[0].mxu0
  %v171 = vadd.f32 %v129, %v170
  %v172 = vpop.f32.mrb[0].mxu0
  %v173 = vpop.f32.mrb[0].mxu0
  %v174 = vadd.f32 %v129, %v173
  %v175 = vpop.f32.mrb[0].mxu0
  %176 = vdwg.mxu0
  %v177 = vmax.f32 %v171, 0.0
  %v178 = vmax.f32 %v174, 0.0
  %v179 = vld [vmem:[%s2] sm:$0xff]
  %v180 = vld [vmem:[%s2 + $0x8] sm:$0xff]
  %v181 = vld [vmem:[%s3] sm:$0xff]
  %v182 = vld [vmem:[%s3 + $0x8] sm:$0xff]
  %vm183 = vcmask 130048
  %v185 = vsel %vm183, %v179, 0
  %v188 = vsel %vm183, %v180, 0
  %190 = vmatprep.subr.mxu0 0.0
  %191 = vmatpush1.msra.mxu0 %v177
  %192 = vmatprep.subr.mxu0 0.0
  %193 = vmatpush1.msra.mxu0 %v178
  %194 = vmatprep.subr.mxu0 0.0
  %195 = vmatpush1.msra.mxu0 0.0
  %196 = vmatprep.subr.mxu0 0.0
  %197 = vmatpush1.msra.mxu0 0.0
  %198 = vmatprep.subr.mxu0 0.0
  %199 = vmatpush1.msra.mxu0 0.0
  %200 = vmatprep.subr.mxu0 0.0
  %201 = vmatpush1.msra.mxu0 0.0
  %202 = vmatprep.subr.mxu0 0.0
  %203 = vmatpush1.msra.mxu0 0.0
  %204 = vmatprep.subr.mxu0 0.0
  %205 = vmatpush1.msra.mxu0 0.0
  %206 = vmatprep.subr.mxu0 0.0
  %207 = vmatpush1.msra.mxu0 0.0
  %208 = vmatprep.subr.mxu0 0.0
  %209 = vmatpush1.msra.mxu0 0.0
  %210 = vmatprep.subr.mxu0 0.0
  %211 = vmatpush1.msra.mxu0 0.0
  %212 = vmatprep.subr.mxu0 0.0
  %213 = vmatpush1.msra.mxu0 0.0
  %214 = vmatprep.subr.mxu0 0.0
  %215 = vmatpush1.msra.mxu0 0.0
  %216 = vmatprep.subr.mxu0 0.0
  %217 = vmatpush1.msra.mxu0 0.0
  %218 = vmatprep.subr.mxu0 0.0
  %219 = vmatpush1.msra.mxu0 0.0
  %220 = vmatprep.subr.mxu0 0.0
  %221 = vmatpush1.msra.mxu0 0.0
  %222 = vmatprep.subr.mxu0 0.0
  %223 = vmatpush1.msra.mxu0 0.0
  %224 = vmatprep.subr.mxu0 0.0
  %225 = vmatpush1.msra.mxu0 0.0
  %226 = vmatprep.subr.mxu0 0.0
  %227 = vmatpush1.msra.mxu0 0.0
  %228 = vmatprep.subr.mxu0 0.0
  %229 = vmatpush1.msra.mxu0 0.0
  %230 = vmatprep.subr.mxu0 0.0
  %231 = vmatpush1.msra.mxu0 0.0
  %232 = vmatprep.subr.mxu0 0.0
  %233 = vmatpush1.msra.mxu0 0.0
  %234 = vmatprep.subr.mxu0 0.0
  %235 = vmatpush1.msra.mxu0 0.0
  %236 = vmatprep.subr.mxu0 0.0
  %237 = vmatpush1.msra.mxu0 0.0
  %238 = vmatprep.subr.mxu0 0.0
  %239 = vmatpush1.msra.mxu0 0.0
  %240 = vmatprep.subr.mxu0 0.0
  %241 = vmatpush1.msra.mxu0 0.0
  %242 = vmatprep.subr.mxu0 0.0
  %243 = vmatpush1.msra.mxu0 0.0
  %244 = vmatprep.subr.mxu0 0.0
  %245 = vmatpush1.msra.mxu0 0.0
  %246 = vmatprep.subr.mxu0 0.0
  %247 = vmatpush1.msra.mxu0 0.0
  %248 = vmatprep.subr.mxu0 0.0
  %249 = vmatpush1.msra.mxu0 0.0
  %250 = vmatprep.subr.mxu0 0.0
  %251 = vmatpush1.msra.mxu0 0.0
  %252 = vmatprep.subr.mxu0 0.0
  %253 = vmatpush1.msra.mxu0 0.0
  %254 = vmatprep.mubr.f32.mxu0 0.0
  %255 = vmatmul.mubr.f32.gmra.mrb[0].mxu0 %v185
  %v256 = vpop.f32.mrb[0].mxu0
  %v257 = vadd.f32 0.0, %v256
  %v258 = vpop.f32.mrb[0].mxu0
  %259 = vmatprep.mubr.f32.mxu0 0.0
  %260 = vmatmul.mubr.f32.gmra.mrb[0].mxu0 %v188
  %v261 = vpop.f32.mrb[0].mxu0
  %v262 = vadd.f32 0.0, %v261
  %v263 = vpop.f32.mrb[0].mxu0
  %264 = vdwg.mxu0
  %vm265 = vcmask 261120
  %v267 = vsel %vm265, %v181, 0
  %v270 = vsel %vm265, %v182, 0
  %272 = vmatprep.subr.mxu0 0.0
  %273 = vmatpush1.msra.mxu0 %v118
  %274 = vmatprep.subr.mxu0 0.0
  %275 = vmatpush1.msra.mxu0 %v119
  %276 = vmatprep.subr.mxu0 0.0
  %277 = vmatpush1.msra.mxu0 %v120
  %278 = vmatprep.subr.mxu0 0.0
  %279 = vmatpush1.msra.mxu0 %v121
  %280 = vmatprep.subr.mxu0 0.0
  %281 = vmatpush1.msra.mxu0 0.0
  %282 = vmatprep.subr.mxu0 0.0
  %283 = vmatpush1.msra.mxu0 0.0
  %284 = vmatprep.subr.mxu0 0.0
  %285 = vmatpush1.msra.mxu0 0.0
  %286 = vmatprep.subr.mxu0 0.0
  %287 = vmatpush1.msra.mxu0 0.0
  %288 = vmatprep.subr.mxu0 0.0
  %289 = vmatpush1.msra.mxu0 0.0
  %290 = vmatprep.subr.mxu0 0.0
  %291 = vmatpush1.msra.mxu0 0.0
  %292 = vmatprep.subr.mxu0 0.0
  %293 = vmatpush1.msra.mxu0 0.0
  %294 = vmatprep.subr.mxu0 0.0
  %295 = vmatpush1.msra.mxu0 0.0
  %296 = vmatprep.subr.mxu0 0.0
  %297 = vmatpush1.msra.mxu0 0.0
  %298 = vmatprep.subr.mxu0 0.0
  %299 = vmatpush1.msra.mxu0 0.0
  %300 = vmatprep.subr.mxu0 0.0
  %301 = vmatpush1.msra.mxu0 0.0
  %302 = vmatprep.subr.mxu0 0.0
  %303 = vmatpush1.msra.mxu0 0.0
  %304 = vmatprep.subr.mxu0 0.0
  %305 = vmatpush1.msra.mxu0 0.0
  %306 = vmatprep.subr.mxu0 0.0
  %307 = vmatpush1.msra.mxu0 0.0
  %308 = vmatprep.subr.mxu0 0.0
  %309 = vmatpush1.msra.mxu0 0.0
  %310 = vmatprep.subr.mxu0 0.0
  %311 = vmatpush1.msra.mxu0 0.0
  %312 = vmatprep.subr.mxu0 0.0
  %313 = vmatpush1.msra.mxu0 0.0
  %314 = vmatprep.subr.mxu0 0.0
  %315 = vmatpush1.msra.mxu0 0.0
  %316 = vmatprep.subr.mxu0 0.0
  %317 = vmatpush1.msra.mxu0 0.0
  %318 = vmatprep.subr.mxu0 0.0
  %319 = vmatpush1.msra.mxu0 0.0
  %320 = vmatprep.subr.mxu0 0.0
  %321 = vmatpush1.msra.mxu0 0.0
  %322 = vmatprep.subr.mxu0 0.0
  %323 = vmatpush1.msra.mxu0 0.0
  %324 = vmatprep.subr.mxu0 0.0
  %325 = vmatpush1.msra.mxu0 0.0
  %326 = vmatprep.subr.mxu0 0.0
  %327 = vmatpush1.msra.mxu0 0.0
  %328 = vmatprep.subr.mxu0 0.0
  %329 = vmatpush1.msra.mxu0 0.0
  %330 = vmatprep.subr.mxu0 0.0
  %331 = vmatpush1.msra.mxu0 0.0
  %332 = vmatprep.subr.mxu0 0.0
  %333 = vmatpush1.msra.mxu0 0.0
  %334 = vmatprep.subr.mxu0 0.0
  %335 = vmatpush1.msra.mxu0 0.0
  %336 = vmatprep.mubr.f32.mxu0 0.0
  %337 = vmatmul.mubr.f32.gmra.mrb[0].mxu0 %v267
  %v338 = vpop.f32.mrb[0].mxu0
  %v339 = vadd.f32 0.0, %v338
  %v340 = vpop.f32.mrb[0].mxu0
  %341 = vmatprep.mubr.f32.mxu0 0.0
  %342 = vmatmul.mubr.f32.gmra.mrb[0].mxu0 %v270
  %v343 = vpop.f32.mrb[0].mxu0
  %v344 = vadd.f32 0.0, %v343
  %v345 = vpop.f32.mrb[0].mxu0
  %346 = vdwg.mxu0
  %v347 = vpack.c.bf16 %v178, %v177
  %v348 = vpack.c.bf16 %v262, %v257
  %v349 = vpack.c.bf16 %v344, %v339
  %v350 = vld [vmem:[%s7] sm:$0xf]
  %v351 = vld [vmem:[%s7 + $0x4] sm:$0xf]
  %v352 = vld [vmem:[%s7 + $0x8] sm:$0xf]
  %v353 = vld [vmem:[%s7 + $0xc] sm:$0xf]
  %v354 = vld [vmem:[%s7 + $0x10] sm:$0xf]
  %v355 = vld [vmem:[%s7 + $0x14] sm:$0xf]
  %v356 = vld [vmem:[%s7 + $0x18] sm:$0xf]
  %v357 = vld [vmem:[%s7 + $0x1c] sm:$0xf]
  %v358 = vld [vmem:[%s7 + $0x20] sm:$0xf]
  %v359 = vld [vmem:[%s7 + $0x24] sm:$0xf]
  %v360 = vld [vmem:[%s7 + $0x28] sm:$0xf]
  %v361 = vld [vmem:[%s7 + $0x2c] sm:$0xf]
  %v362 = vld [vmem:[%s7 + $0x30] sm:$0xf]
  %v363 = vld [vmem:[%s7 + $0x34] sm:$0xf]
  %v364 = vld [vmem:[%s7 + $0x38] sm:$0xf]
  %v365 = vld [vmem:[%s7 + $0x3c] sm:$0xf]
  %v366 = vld [vmem:[%s7 + $0x40] sm:$0xf]
  %v367 = vld [vmem:[%s7 + $0x44] sm:$0xf]
  %v368 = vld [vmem:[%s7 + $0x48] sm:$0xf]
  %v369 = vld [vmem:[%s7 + $0x4c] sm:$0xf]
  %v370 = vld [vmem:[%s7 + $0x50] sm:$0xf]
  %v371 = vld [vmem:[%s7 + $0x54] sm:$0xf]
  %v372 = vld [vmem:[%s7 + $0x58] sm:$0xf]
  %v373 = vld [vmem:[%s7 + $0x5c] sm:$0xf]
  %v374 = vld [vmem:[%s7 + $0x60] sm:$0xf]
  %v375 = vld [vmem:[%s7 + $0x64] sm:$0xf]
  %v376 = vld [vmem:[%s7 + $0x68] sm:$0xf]
  %v377 = vld [vmem:[%s7 + $0x6c] sm:$0xf]
  %v378 = vld [vmem:[%s7 + $0x70] sm:$0xf]
  %v379 = vld [vmem:[%s7 + $0x74] sm:$0xf]
  %v380 = vld [vmem:[%s7 + $0x78] sm:$0xf]
  %v381 = vld [vmem:[%s7 + $0x7c] sm:$0xf]
  %v382 = vld [vmem:[%s7 + $0x80] sm:$0xf]
  %v383 = vld [vmem:[%s7 + $0x84] sm:$0xf]
  %v384 = vld [vmem:[%s7 + $0x88] sm:$0xf]
  %v385 = vld [vmem:[%s7 + $0x8c] sm:$0xf]
  %v386 = vld [vmem:[%s7 + $0x90] sm:$0xf]
  %v387 = vld [vmem:[%s7 + $0x94] sm:$0xf]
  %v388 = vld [vmem:[%s7 + $0x98] sm:$0xf]
  %v389 = vld [vmem:[%s7 + $0x9c] sm:$0xf]
  %v390 = vld [vmem:[%s7 + $0xa0] sm:$0xf]
  %v391 = vld [vmem:[%s7 + $0xa4] sm:$0xf]
  %v392 = vld [vmem:[%s7 + $0xa8] sm:$0xf]
  %v393 = vld [vmem:[%s7 + $0xac] sm:$0xf]
  %v394 = vld [vmem:[%s7 + $0xb0] sm:$0xf]
  %v395 = vld [vmem:[%s7 + $0xb4] sm:$0xf]
  %v396 = vld [vmem:[%s7 + $0xb8] sm:$0xf]
  %v397 = vld [vmem:[%s7 + $0xbc] sm:$0xf]
  %v398 = vlaneseq
  %v399 = vshrl.u32 %v398, 7
  %v400 = vsub.s32 2, %v399
  %v401 = vrot.slane %v45, %v400
  %v450 = vunpack.c.l.b16 %v350
  %v451 = vunpack.c.l.b16 %v351
  %v452 = vunpack.c.l.b16 %v352
  %v453 = vunpack.c.l.b16 %v353
  %v454 = vunpack.c.l.b16 %v354
  %v455 = vunpack.c.l.b16 %v355
  %v456 = vunpack.c.l.b16 %v356
  %v457 = vunpack.c.l.b16 %v357
  %v458 = vunpack.c.l.b16 %v358
  %v459 = vunpack.c.l.b16 %v359
  %v460 = vunpack.c.l.b16 %v360
  %v461 = vunpack.c.l.b16 %v361
  %v462 = vunpack.c.l.b16 %v362
  %v463 = vunpack.c.l.b16 %v363
  %v464 = vunpack.c.l.b16 %v364
  %v465 = vunpack.c.l.b16 %v365
  %v466 = vunpack.c.l.b16 %v366
  %v467 = vunpack.c.l.b16 %v367
  %v468 = vunpack.c.l.b16 %v368
  %v469 = vunpack.c.l.b16 %v369
  %v470 = vunpack.c.l.b16 %v370
  %v471 = vunpack.c.l.b16 %v371
  %v472 = vunpack.c.l.b16 %v372
  %v473 = vunpack.c.l.b16 %v373
  %v474 = vunpack.c.l.b16 %v374
  %v475 = vunpack.c.l.b16 %v375
  %v476 = vunpack.c.l.b16 %v376
  %v477 = vunpack.c.l.b16 %v377
  %v478 = vunpack.c.l.b16 %v378
  %v479 = vunpack.c.l.b16 %v379
  %v480 = vunpack.c.l.b16 %v380
  %v481 = vunpack.c.l.b16 %v381
  %v482 = vunpack.c.l.b16 %v382
  %v483 = vunpack.c.l.b16 %v383
  %v484 = vunpack.c.l.b16 %v384
  %v485 = vunpack.c.l.b16 %v385
  %v486 = vunpack.c.l.b16 %v386
  %v487 = vunpack.c.l.b16 %v387
  %v488 = vunpack.c.l.b16 %v388
  %v489 = vunpack.c.l.b16 %v389
  %v490 = vunpack.c.l.b16 %v390
  %v491 = vunpack.c.l.b16 %v391
  %v492 = vunpack.c.l.b16 %v392
  %v493 = vunpack.c.l.b16 %v393
  %v494 = vunpack.c.l.b16 %v394
  %v495 = vunpack.c.l.b16 %v395
  %v496 = vunpack.c.l.b16 %v396
  %v497 = vunpack.c.l.b16 %v397
  %v498 = vpack.c.b16 %v451, %v450
  %v499 = vpack.c.b16 %v453, %v452
  %v500 = vpack.c.b16 %v455, %v454
  %v501 = vpack.c.b16 %v457, %v456
  %v502 = vpack.c.b16 %v459, %v458
  %v503 = vpack.c.b16 %v461, %v460
  %v504 = vpack.c.b16 %v463, %v462
  %v505 = vpack.c.b16 %v465, %v464
  %v506 = vpack.c.b16 %v467, %v466
  %v507 = vpack.c.b16 %v469, %v468
  %v508 = vpack.c.b16 %v471, %v470
  %v509 = vpack.c.b16 %v473, %v472
  %v510 = vpack.c.b16 %v475, %v474
  %v511 = vpack.c.b16 %v477, %v476
  %v512 = vpack.c.b16 %v479, %v478
  %v513 = vpack.c.b16 %v481, %v480
  %v514 = vpack.c.b16 %v483, %v482
  %v515 = vpack.c.b16 %v485, %v484
  %v516 = vpack.c.b16 %v487, %v486
  %v517 = vpack.c.b16 %v489, %v488
  %v518 = vpack.c.b16 %v491, %v490
  %v519 = vpack.c.b16 %v493, %v492
  %v520 = vpack.c.b16 %v495, %v494
  %v521 = vpack.c.b16 %v497, %v496
  %546 = vmatprep.subr.bf16.mxu0 0
  %547 = vmatpush1.bf16.msra.mxu0 %v498
  %548 = vmatprep.subr.bf16.mxu0 0
  %549 = vmatpush1.bf16.msra.mxu0 %v499
  %550 = vmatprep.subr.bf16.mxu0 0
  %551 = vmatpush1.bf16.msra.mxu0 %v500
  %552 = vmatprep.subr.bf16.mxu0 0
  %553 = vmatpush1.bf16.msra.mxu0 %v501
  %554 = vmatprep.subr.bf16.mxu0 0
  %555 = vmatpush1.bf16.msra.mxu0 %v502
  %556 = vmatprep.subr.bf16.mxu0 0
  %557 = vmatpush1.bf16.msra.mxu0 %v503
  %558 = vmatprep.subr.bf16.mxu0 0
  %559 = vmatpush1.bf16.msra.mxu0 %v504
  %560 = vmatprep.subr.bf16.mxu0 0
  %561 = vmatpush1.bf16.msra.mxu0 %v505
  %562 = vmatprep.subr.bf16.mxu0 0
  %563 = vmatpush1.bf16.msra.mxu0 %v506
  %564 = vmatprep.subr.bf16.mxu0 0
  %565 = vmatpush1.bf16.msra.mxu0 %v507
  %566 = vmatprep.subr.bf16.mxu0 0
  %567 = vmatpush1.bf16.msra.mxu0 %v508
  %568 = vmatprep.subr.bf16.mxu0 0
  %569 = vmatpush1.bf16.msra.mxu0 %v509
  %570 = vmatprep.subr.bf16.mxu0 0
  %571 = vmatpush1.bf16.msra.mxu0 %v510
  %572 = vmatprep.subr.bf16.mxu0 0
  %573 = vmatpush1.bf16.msra.mxu0 %v511
  %574 = vmatprep.subr.bf16.mxu0 0
  %575 = vmatpush1.bf16.msra.mxu0 %v512
  %576 = vmatprep.subr.bf16.mxu0 0
  %577 = vmatpush1.bf16.msra.mxu0 %v513
  %578 = vmatprep.mubr.bf16.mxu0 %v348
  %579 = vmatmul.mubr.bf16.gmra.mrb[0].mxu0 %v347
  %v580 = vpop.f32.mrb[0].mxu0
  %v581 = vadd.f32 %v401, %v580
  %v582 = vpop.f32.mrb[0].mxu0
  %v583 = vpop.f32.mrb[0].mxu0
  %v584 = vadd.f32 %v401, %v583
  %v585 = vpop.f32.mrb[0].mxu0
  %586 = vdwg.mxu0
  %587 = vmatprep.subr.bf16.mxu0 0
  %588 = vmatpush1.bf16.msra.mxu0 %v514
  %589 = vmatprep.subr.bf16.mxu0 0
  %590 = vmatpush1.bf16.msra.mxu0 %v515
  %591 = vmatprep.subr.bf16.mxu0 0
  %592 = vmatpush1.bf16.msra.mxu0 %v516
  %593 = vmatprep.subr.bf16.mxu0 0
  %594 = vmatpush1.bf16.msra.mxu0 %v517
  %595 = vmatprep.subr.bf16.mxu0 0
  %596 = vmatpush1.bf16.msra.mxu0 %v518
  %597 = vmatprep.subr.bf16.mxu0 0
  %598 = vmatpush1.bf16.msra.mxu0 %v519
  %599 = vmatprep.subr.bf16.mxu0 0
  %600 = vmatpush1.bf16.msra.mxu0 %v520
  %601 = vmatprep.subr.bf16.mxu0 0
  %602 = vmatpush1.bf16.msra.mxu0 %v521
  %603 = vmatprep.subr.bf16.mxu0 0
  %604 = vmatpush1.bf16.msra.mxu0 0
  %605 = vmatprep.subr.bf16.mxu0 0
  %606 = vmatpush1.bf16.msra.mxu0 0
  %607 = vmatprep.subr.bf16.mxu0 0
  %608 = vmatpush1.bf16.msra.mxu0 0
  %609 = vmatprep.subr.bf16.mxu0 0
  %610 = vmatpush1.bf16.msra.mxu0 0
  %611 = vmatprep.subr.bf16.mxu0 0
  %612 = vmatpush1.bf16.msra.mxu0 0
  %613 = vmatprep.subr.bf16.mxu0 0
  %614 = vmatpush1.bf16.msra.mxu0 0
  %615 = vmatprep.subr.bf16.mxu0 0
  %616 = vmatpush1.bf16.msra.mxu0 0
  %617 = vmatprep.subr.bf16.mxu0 0
  %618 = vmatpush1.bf16.msra.mxu0 0
  %619 = vmatprep.mubr.bf16.mxu0 0
  %620 = vmatmul.mubr.bf16.gmra.mrb[0].mxu0 %v349
  %v621 = vpop.f32.mrb[0].mxu0
  %v622 = vadd.f32 %v581, %v621
  %v623 = vpop.f32.mrb[0].mxu0
  %v624 = vpop.f32.mrb[0].mxu0
  %v625 = vadd.f32 %v584, %v624
  %v626 = vpop.f32.mrb[0].mxu0
  %627 = vdwg.mxu0
  %v628 = vadd.f32 %v177, %v622
  %v629 = vadd.f32 %v178, %v625
  %v630 = vmax.f32 %v628, 0.0
  %v631 = vmax.f32 %v629, 0.0
  %v632 = vpack.c.bf16 %v631, %v630
  %v633 = vld [vmem:[%s8] sm:$0xf]
  %v634 = vld [vmem:[%s8 + $0x4] sm:$0xf]
  %v635 = vld [vmem:[%s8 + $0x8] sm:$0xf]
  %v636 = vld [vmem:[%s8 + $0xc] sm:$0xf]
  %v637 = vld [vmem:[%s8 + $0x10] sm:$0xf]
  %v638 = vld [vmem:[%s8 + $0x14] sm:$0xf]
  %v639 = vld [vmem:[%s8 + $0x18] sm:$0xf]
  %v640 = vld [vmem:[%s8 + $0x1c] sm:$0xf]
  %v641 = vld [vmem:[%s8 + $0x20] sm:$0xf]
  %v642 = vld [vmem:[%s8 + $0x24] sm:$0xf]
  %v643 = vld [vmem:[%s8 + $0x28] sm:$0xf]
  %v644 = vld [vmem:[%s8 + $0x2c] sm:$0xf]
  %v645 = vld [vmem:[%s8 + $0x30] sm:$0xf]
  %v646 = vld [vmem:[%s8 + $0x34] sm:$0xf]
  %v647 = vld [vmem:[%s8 + $0x38] sm:$0xf]
  %v648 = vld [vmem:[%s8 + $0x3c] sm:$0xf]
  %v649 = vlaneseq
  %v650 = vshrl.u32 %v649, 7
  %v651 = vsub.s32 3, %v650
  %v652 = vrot.slane %v45, %v651
  %v669 = vunpack.c.l.b16 %v633
  %v670 = vunpack.c.l.b16 %v634
  %v671 = vunpack.c.l.b16 %v635
  %v672 = vunpack.c.l.b16 %v636
  %v673 = vunpack.c.l.b16 %v637
  %v674 = vunpack.c.l.b16 %v638
  %v675 = vunpack.c.l.b16 %v639
  %v676 = vunpack.c.l.b16 %v640
  %v677 = vunpack.c.l.b16 %v641
  %v678 = vunpack.c.l.b16 %v642
  %v679 = vunpack.c.l.b16 %v643
  %v680 = vunpack.c.l.b16 %v644
  %v681 = vunpack.c.l.b16 %v645
  %v682 = vunpack.c.l.b16 %v646
  %v683 = vunpack.c.l.b16 %v647
  %v684 = vunpack.c.l.b16 %v648
  %v685 = vpack.c.b16 %v670, %v669
  %v686 = vpack.c.b16 %v672, %v671
  %v687 = vpack.c.b16 %v674, %v673
  %v688 = vpack.c.b16 %v676, %v675
  %v689 = vpack.c.b16 %v678, %v677
  %v690 = vpack.c.b16 %v680, %v679
  %v691 = vpack.c.b16 %v682, %v681
  %v692 = vpack.c.b16 %v684, %v683
  %701 = vmatprep.subr.bf16.mxu0 0
  %702 = vmatpush1.bf16.msra.mxu0 %v685
  %703 = vmatprep.subr.bf16.mxu0 0
  %704 = vmatpush1.bf16.msra.mxu0 %v686
  %705 = vmatprep.subr.bf16.mxu0 0
  %706 = vmatpush1.bf16.msra.mxu0 %v687
  %707 = vmatprep.subr.bf16.mxu0 0
  %708 = vmatpush1.bf16.msra.mxu0 %v688
  %709 = vmatprep.subr.bf16.mxu0 0
  %710 = vmatpush1.bf16.msra.mxu0 %v689
  %711 = vmatprep.subr.bf16.mxu0 0
  %712 = vmatpush1.bf16.msra.mxu0 %v690
  %713 = vmatprep.subr.bf16.mxu0 0
  %714 = vmatpush1.bf16.msra.mxu0 %v691
  %715 = vmatprep.subr.bf16.mxu0 0
  %716 = vmatpush1.bf16.msra.mxu0 %v692
  %717 = vmatprep.subr.bf16.mxu0 0
  %718 = vmatpush1.bf16.msra.mxu0 0
  %719 = vmatprep.subr.bf16.mxu0 0
  %720 = vmatpush1.bf16.msra.mxu0 0
  %721 = vmatprep.subr.bf16.mxu0 0
  %722 = vmatpush1.bf16.msra.mxu0 0
  %723 = vmatprep.subr.bf16.mxu0 0
  %724 = vmatpush1.bf16.msra.mxu0 0
  %725 = vmatprep.subr.bf16.mxu0 0
  %726 = vmatpush1.bf16.msra.mxu0 0
  %727 = vmatprep.subr.bf16.mxu0 0
  %728 = vmatpush1.bf16.msra.mxu0 0
  %729 = vmatprep.subr.bf16.mxu0 0
  %730 = vmatpush1.bf16.msra.mxu0 0
  %731 = vmatprep.subr.bf16.mxu0 0
  %732 = vmatpush1.bf16.msra.mxu0 0
  %733 = vmatprep.mubr.bf16.mxu0 0
  %734 = vmatmul.mubr.bf16.gmra.mrb[0].mxu0 %v632
  %v735 = vpop.f32.mrb[0].mxu0
  %v736 = vadd.f32 %v652, %v735
  %v737 = vpop.f32.mrb[0].mxu0
  %v738 = vpop.f32.mrb[0].mxu0
  %v739 = vadd.f32 %v652, %v738
  %v740 = vpop.f32.mrb[0].mxu0
  %741 = vdwg.mxu0
  %v742 = vmax.f32 %v736, 0.0
  %v743 = vmax.f32 %v739, 0.0
  %744 = vadd.xlane.f32.xlu0 %v742
  %v745 = vpop.xlane.xlu0 %744
  %746 = vadd.xlane.f32.xlu0 %v743
  %v747 = vpop.xlane.xlu0 %746
  %v748 = vrcp.pop 128.0
  %v749 = vmul.f32 %v745, %v748
  %v750 = vmul.f32 %v747, %v748
  %v751 = vmul.f32 %v742, %v742
  %v752 = vmul.f32 %v743, %v743
  %753 = vadd.xlane.f32.xlu0 %v751
  %v754 = vpop.xlane.xlu0 %753
  %755 = vadd.xlane.f32.xlu0 %v752
  %v756 = vpop.xlane.xlu0 %755
  %v757 = vmul.f32 %v754, %v748
  %v758 = vmul.f32 %v756, %v748
  %v759 = vmul.f32 %v749, %v749
  %v760 = vmul.f32 %v750, %v750
  %v761 = vsub.f32 %v757, %v759
  %v762 = vsub.f32 %v758, %v760
  %v763 = vmax.f32 %v761, 0.0
  %v764 = vmax.f32 %v762, 0.0
  %v765 = vsub.f32 %v742, %v749
  %v766 = vsub.f32 %v743, %v750
  %v767 = vadd.f32 %v763, 1e-05
  %v768 = vadd.f32 %v764, 1e-05
  %v769 = vrsqrt.pop %v767
  %v770 = vrsqrt.pop %v768
  %v771 = vmul.f32 %v765, %v769
  %v772 = vmul.f32 %v766, %v770
  %v773 = vlaneseq
  %v774 = vshrl.u32 %v773, 7
  %v775 = vsub.s32 4, %v774
  %v776 = vrot.slane %v45, %v775
  %v777 = vmul.f32 %v771, %v776
  %v778 = vmul.f32 %v772, %v776
  %v779 = vlaneseq
  %v780 = vshrl.u32 %v779, 7
  %v781 = vsub.s32 5, %v780
  %v782 = vrot.slane %v45, %v781
  %v783 = vadd.f32 %v777, %v782
  %v784 = vadd.f32 %v778, %v782
  %v785 = vadd.f32 %v630, %v783
  %v786 = vadd.f32 %v631, %v784
  %v787 = vpack.c.bf16 %v119, %v118
  %v788 = vpack.c.bf16 %v121, %v120
  %v789 = vld [vmem:[%s9] sm:$0xf]
  %v790 = vld [vmem:[%s9 + $0x4] sm:$0xf]
  %v791 = vld [vmem:[%s9 + $0x8] sm:$0xf]
  %v792 = vld [vmem:[%s9 + $0xc] sm:$0xf]
  %v793 = vld [vmem:[%s9 + $0x10] sm:$0xf]
  %v794 = vld [vmem:[%s9 + $0x14] sm:$0xf]
  %v795 = vld [vmem:[%s9 + $0x18] sm:$0xf]
  %v796 = vld [vmem:[%s9 + $0x1c] sm:$0xf]
  %v797 = vld [vmem:[%s9 + $0x20] sm:$0xf]
  %v798 = vld [vmem:[%s9 + $0x24] sm:$0xf]
  %v799 = vld [vmem:[%s9 + $0x28] sm:$0xf]
  %v800 = vld [vmem:[%s9 + $0x2c] sm:$0xf]
  %v801 = vld [vmem:[%s9 + $0x30] sm:$0xf]
  %v802 = vld [vmem:[%s9 + $0x34] sm:$0xf]
  %v803 = vld [vmem:[%s9 + $0x38] sm:$0xf]
  %v804 = vld [vmem:[%s9 + $0x3c] sm:$0xf]
  %v805 = vlaneseq
  %v806 = vshrl.u32 %v805, 7
  %v807 = vsub.s32 6, %v806
  %v808 = vrot.slane %v45, %v807
  %v825 = vunpack.c.l.b16 %v789
  %v826 = vunpack.c.l.b16 %v790
  %v827 = vunpack.c.l.b16 %v791
  %v828 = vunpack.c.l.b16 %v792
  %v829 = vunpack.c.l.b16 %v793
  %v830 = vunpack.c.l.b16 %v794
  %v831 = vunpack.c.l.b16 %v795
  %v832 = vunpack.c.l.b16 %v796
  %v833 = vunpack.c.l.b16 %v797
  %v834 = vunpack.c.l.b16 %v798
  %v835 = vunpack.c.l.b16 %v799
  %v836 = vunpack.c.l.b16 %v800
  %v837 = vunpack.c.l.b16 %v801
  %v838 = vunpack.c.l.b16 %v802
  %v839 = vunpack.c.l.b16 %v803
  %v840 = vunpack.c.l.b16 %v804
  %v841 = vpack.c.b16 %v826, %v825
  %v842 = vpack.c.b16 %v828, %v827
  %v843 = vpack.c.b16 %v830, %v829
  %v844 = vpack.c.b16 %v832, %v831
  %v845 = vpack.c.b16 %v834, %v833
  %v846 = vpack.c.b16 %v836, %v835
  %v847 = vpack.c.b16 %v838, %v837
  %v848 = vpack.c.b16 %v840, %v839
  %857 = vmatprep.subr.bf16.mxu0 0
  %858 = vmatpush1.bf16.msra.mxu0 %v841
  %859 = vmatprep.subr.bf16.mxu0 0
  %860 = vmatpush1.bf16.msra.mxu0 %v842
  %861 = vmatprep.subr.bf16.mxu0 0
  %862 = vmatpush1.bf16.msra.mxu0 %v843
  %863 = vmatprep.subr.bf16.mxu0 0
  %864 = vmatpush1.bf16.msra.mxu0 %v844
  %865 = vmatprep.subr.bf16.mxu0 0
  %866 = vmatpush1.bf16.msra.mxu0 %v845
  %867 = vmatprep.subr.bf16.mxu0 0
  %868 = vmatpush1.bf16.msra.mxu0 %v846
  %869 = vmatprep.subr.bf16.mxu0 0
  %870 = vmatpush1.bf16.msra.mxu0 %v847
  %871 = vmatprep.subr.bf16.mxu0 0
  %872 = vmatpush1.bf16.msra.mxu0 %v848
  %873 = vmatprep.subr.bf16.mxu0 0
  %874 = vmatpush1.bf16.msra.mxu0 0
  %875 = vmatprep.subr.bf16.mxu0 0
  %876 = vmatpush1.bf16.msra.mxu0 0
  %877 = vmatprep.subr.bf16.mxu0 0
  %878 = vmatpush1.bf16.msra.mxu0 0
  %879 = vmatprep.subr.bf16.mxu0 0
  %880 = vmatpush1.bf16.msra.mxu0 0
  %881 = vmatprep.subr.bf16.mxu0 0
  %882 = vmatpush1.bf16.msra.mxu0 0
  %883 = vmatprep.subr.bf16.mxu0 0
  %884 = vmatpush1.bf16.msra.mxu0 0
  %885 = vmatprep.subr.bf16.mxu0 0
  %886 = vmatpush1.bf16.msra.mxu0 0
  %887 = vmatprep.subr.bf16.mxu0 0
  %888 = vmatpush1.bf16.msra.mxu0 0
  %889 = vmatprep.mubr.bf16.mxu0 0
  %890 = vmatmul.mubr.bf16.gmra.mrb[0].mxu0 %v787
  %v891 = vpop.f32.mrb[0].mxu0
  %v892 = vadd.f32 %v808, %v891
  %v893 = vpop.f32.mrb[0].mxu0
  %v894 = vpop.f32.mrb[0].mxu0
  %v895 = vadd.f32 %v808, %v894
  %v896 = vpop.f32.mrb[0].mxu0
  %897 = vmatprep.mubr.bf16.mxu0 0
  %898 = vmatmul.mubr.bf16.gmra.mrb[0].mxu0 %v788
  %v899 = vpop.f32.mrb[0].mxu0
  %v900 = vadd.f32 %v808, %v899
  %v901 = vpop.f32.mrb[0].mxu0
  %v902 = vpop.f32.mrb[0].mxu0
  %v903 = vadd.f32 %v808, %v902
  %v904 = vpop.f32.mrb[0].mxu0
  %905 = vdwg.mxu0
  %v906 = vmax.f32 %v892, 0.0
  %v907 = vmax.f32 %v895, 0.0
  %v908 = vmax.f32 %v900, 0.0
  %v909 = vmax.f32 %v903, 0.0
  %v910 = vpack.c.bf16 %v907, %v906
  %v911 = vpack.c.bf16 %v909, %v908
  %v912 = vld [vmem:[%s10] sm:$0xf]
  %v913 = vld [vmem:[%s10 + $0x4] sm:$0xf]
  %v914 = vld [vmem:[%s10 + $0x8] sm:$0xf]
  %v915 = vld [vmem:[%s10 + $0xc] sm:$0xf]
  %v916 = vld [vmem:[%s10 + $0x10] sm:$0xf]
  %v917 = vld [vmem:[%s10 + $0x14] sm:$0xf]
  %v918 = vld [vmem:[%s10 + $0x18] sm:$0xf]
  %v919 = vld [vmem:[%s10 + $0x1c] sm:$0xf]
  %v920 = vld [vmem:[%s10 + $0x20] sm:$0xf]
  %v921 = vld [vmem:[%s10 + $0x24] sm:$0xf]
  %v922 = vld [vmem:[%s10 + $0x28] sm:$0xf]
  %v923 = vld [vmem:[%s10 + $0x2c] sm:$0xf]
  %v924 = vld [vmem:[%s10 + $0x30] sm:$0xf]
  %v925 = vld [vmem:[%s10 + $0x34] sm:$0xf]
  %v926 = vld [vmem:[%s10 + $0x38] sm:$0xf]
  %v927 = vld [vmem:[%s10 + $0x3c] sm:$0xf]
  %v944 = vunpack.c.l.b16 %v912
  %v945 = vunpack.c.l.b16 %v913
  %v946 = vunpack.c.l.b16 %v914
  %v947 = vunpack.c.l.b16 %v915
  %v948 = vunpack.c.l.b16 %v916
  %v949 = vunpack.c.l.b16 %v917
  %v950 = vunpack.c.l.b16 %v918
  %v951 = vunpack.c.l.b16 %v919
  %v952 = vunpack.c.l.b16 %v920
  %v953 = vunpack.c.l.b16 %v921
  %v954 = vunpack.c.l.b16 %v922
  %v955 = vunpack.c.l.b16 %v923
  %v956 = vunpack.c.l.b16 %v924
  %v957 = vunpack.c.l.b16 %v925
  %v958 = vunpack.c.l.b16 %v926
  %v959 = vunpack.c.l.b16 %v927
  %v960 = vpack.c.b16 %v945, %v944
  %v961 = vpack.c.b16 %v947, %v946
  %v962 = vpack.c.b16 %v949, %v948
  %v963 = vpack.c.b16 %v951, %v950
  %v964 = vpack.c.b16 %v953, %v952
  %v965 = vpack.c.b16 %v955, %v954
  %v966 = vpack.c.b16 %v957, %v956
  %v967 = vpack.c.b16 %v959, %v958
  %976 = vmatprep.subr.bf16.mxu0 0
  %977 = vmatpush1.bf16.msra.mxu0 %v960
  %978 = vmatprep.subr.bf16.mxu0 0
  %979 = vmatpush1.bf16.msra.mxu0 %v961
  %980 = vmatprep.subr.bf16.mxu0 0
  %981 = vmatpush1.bf16.msra.mxu0 %v962
  %982 = vmatprep.subr.bf16.mxu0 0
  %983 = vmatpush1.bf16.msra.mxu0 %v963
  %984 = vmatprep.subr.bf16.mxu0 0
  %985 = vmatpush1.bf16.msra.mxu0 %v964
  %986 = vmatprep.subr.bf16.mxu0 0
  %987 = vmatpush1.bf16.msra.mxu0 %v965
  %988 = vmatprep.subr.bf16.mxu0 0
  %989 = vmatpush1.bf16.msra.mxu0 %v966
  %990 = vmatprep.subr.bf16.mxu0 0
  %991 = vmatpush1.bf16.msra.mxu0 %v967
  %992 = vmatprep.subr.bf16.mxu0 0
  %993 = vmatpush1.bf16.msra.mxu0 0
  %994 = vmatprep.subr.bf16.mxu0 0
  %995 = vmatpush1.bf16.msra.mxu0 0
  %996 = vmatprep.subr.bf16.mxu0 0
  %997 = vmatpush1.bf16.msra.mxu0 0
  %998 = vmatprep.subr.bf16.mxu0 0
  %999 = vmatpush1.bf16.msra.mxu0 0
  %1000 = vmatprep.subr.bf16.mxu0 0
  %1001 = vmatpush1.bf16.msra.mxu0 0
  %1002 = vmatprep.subr.bf16.mxu0 0
  %1003 = vmatpush1.bf16.msra.mxu0 0
  %1004 = vmatprep.subr.bf16.mxu0 0
  %1005 = vmatpush1.bf16.msra.mxu0 0
  %1006 = vmatprep.subr.bf16.mxu0 0
  %1007 = vmatpush1.bf16.msra.mxu0 0
  %1008 = vmatprep.mubr.bf16.mxu0 0
  %1009 = vmatmul.mubr.bf16.gmra.mrb[0].mxu0 %v910
  %v1010 = vpop.f32.mrb[0].mxu0
  %v1011 = vadd.f32 0.0, %v1010
  %v1012 = vpop.f32.mrb[0].mxu0
  %v1013 = vpop.f32.mrb[0].mxu0
  %v1014 = vadd.f32 0.0, %v1013
  %v1015 = vpop.f32.mrb[0].mxu0
  %1016 = vmatprep.mubr.bf16.mxu0 0
  %1017 = vmatmul.mubr.bf16.gmra.mrb[0].mxu0 %v911
  %v1018 = vpop.f32.mrb[0].mxu0
  %v1019 = vadd.f32 0.0, %v1018
  %v1020 = vpop.f32.mrb[0].mxu0
  %v1021 = vpop.f32.mrb[0].mxu0
  %v1022 = vadd.f32 0.0, %v1021
  %v1023 = vpop.f32.mrb[0].mxu0
  %1024 = vdwg.mxu0
  %v1025 = vadd.f32 %v118, %v1011
  %v1026 = vadd.f32 %v119, %v1014
  %v1027 = vadd.f32 %v120, %v1019
  %v1028 = vadd.f32 %v121, %v1022
  %v1029 = vlaneseq
  %v1030 = vshrl.u32 %v1029, 7
  %v1031 = vsub.s32 7, %v1030
  %v1032 = vrot.slane %v45, %v1031
  %v1033 = vadd.f32 %v1025, %v1032
  %v1034 = vadd.f32 %v1026, %v1032
  %v1035 = vadd.f32 %v1027, %v1032
  %v1036 = vadd.f32 %v1028, %v1032
  %1037 = vmatprep.subr.mxu0 0.0
  %1038 = vmatpush1.msra.mxu0 %v785
  %1039 = vmatprep.subr.mxu0 0.0
  %1040 = vmatpush1.msra.mxu0 %v786
  %1041 = vmatprep.subr.mxu0 0.0
  %1042 = vmatpush1.msra.mxu0 0.0
  %1043 = vmatprep.subr.mxu0 0.0
  %1044 = vmatpush1.msra.mxu0 0.0
  %1045 = vmatprep.subr.mxu0 0.0
  %1046 = vmatpush1.msra.mxu0 0.0
  %1047 = vmatprep.subr.mxu0 0.0
  %1048 = vmatpush1.msra.mxu0 0.0
  %1049 = vmatprep.subr.mxu0 0.0
  %1050 = vmatpush1.msra.mxu0 0.0
  %1051 = vmatprep.subr.mxu0 0.0
  %1052 = vmatpush1.msra.mxu0 0.0
  %1053 = vmatprep.subr.mxu0 0.0
  %1054 = vmatpush1.msra.mxu0 0.0
  %1055 = vmatprep.subr.mxu0 0.0
  %1056 = vmatpush1.msra.mxu0 0.0
  %1057 = vmatprep.subr.mxu0 0.0
  %1058 = vmatpush1.msra.mxu0 0.0
  %1059 = vmatprep.subr.mxu0 0.0
  %1060 = vmatpush1.msra.mxu0 0.0
  %1061 = vmatprep.subr.mxu0 0.0
  %1062 = vmatpush1.msra.mxu0 0.0
  %1063 = vmatprep.subr.mxu0 0.0
  %1064 = vmatpush1.msra.mxu0 0.0
  %1065 = vmatprep.subr.mxu0 0.0
  %1066 = vmatpush1.msra.mxu0 0.0
  %1067 = vmatprep.subr.mxu0 0.0
  %1068 = vmatpush1.msra.mxu0 0.0
  %1069 = vmatprep.subr.mxu0 0.0
  %1070 = vmatpush1.msra.mxu0 0.0
  %1071 = vmatprep.subr.mxu0 0.0
  %1072 = vmatpush1.msra.mxu0 0.0
  %1073 = vmatprep.subr.mxu0 0.0
  %1074 = vmatpush1.msra.mxu0 0.0
  %1075 = vmatprep.subr.mxu0 0.0
  %1076 = vmatpush1.msra.mxu0 0.0
  %1077 = vmatprep.subr.mxu0 0.0
  %1078 = vmatpush1.msra.mxu0 0.0
  %1079 = vmatprep.subr.mxu0 0.0
  %1080 = vmatpush1.msra.mxu0 0.0
  %1081 = vmatprep.subr.mxu0 0.0
  %1082 = vmatpush1.msra.mxu0 0.0
  %1083 = vmatprep.subr.mxu0 0.0
  %1084 = vmatpush1.msra.mxu0 0.0
  %1085 = vmatprep.subr.mxu0 0.0
  %1086 = vmatpush1.msra.mxu0 0.0
  %1087 = vmatprep.subr.mxu0 0.0
  %1088 = vmatpush1.msra.mxu0 0.0
  %1089 = vmatprep.subr.mxu0 0.0
  %1090 = vmatpush1.msra.mxu0 0.0
  %1091 = vmatprep.subr.mxu0 0.0
  %1092 = vmatpush1.msra.mxu0 0.0
  %1093 = vmatprep.subr.mxu0 0.0
  %1094 = vmatpush1.msra.mxu0 0.0
  %1095 = vmatprep.subr.mxu0 0.0
  %1096 = vmatpush1.msra.mxu0 0.0
  %1097 = vmatprep.subr.mxu0 0.0
  %1098 = vmatpush1.msra.mxu0 0.0
  %1099 = vmatprep.subr.mxu0 0.0
  %1100 = vmatpush1.msra.mxu0 0.0
  %1101 = vmatprep.mubr.f32.mxu0 0.0
  %1102 = vmatmul.mubr.f32.gmra.mrb[0].mxu0 %v185
  %v1103 = vpop.f32.mrb[0].mxu0
  %v1104 = vadd.f32 0.0, %v1103
  %v1105 = vpop.f32.mrb[0].mxu0
  %1106 = vmatprep.mubr.f32.mxu0 0.0
  %1107 = vmatmul.mubr.f32.gmra.mrb[0].mxu0 %v188
  %v1108 = vpop.f32.mrb[0].mxu0
  %v1109 = vadd.f32 0.0, %v1108
  %v1110 = vpop.f32.mrb[0].mxu0
  %1111 = vdwg.mxu0
  %1112 = vmatprep.subr.mxu0 0.0
  %1113 = vmatpush1.msra.mxu0 %v1033
  %1114 = vmatprep.subr.mxu0 0.0
  %1115 = vmatpush1.msra.mxu0 %v1034
  %1116 = vmatprep.subr.mxu0 0.0
  %1117 = vmatpush1.msra.mxu0 %v1035
  %1118 = vmatprep.subr.mxu0 0.0
  %1119 = vmatpush1.msra.mxu0 %v1036
  %1120 = vmatprep.subr.mxu0 0.0
  %1121 = vmatpush1.msra.mxu0 0.0
  %1122 = vmatprep.subr.mxu0 0.0
  %1123 = vmatpush1.msra.mxu0 0.0
  %1124 = vmatprep.subr.mxu0 0.0
  %1125 = vmatpush1.msra.mxu0 0.0
  %1126 = vmatprep.subr.mxu0 0.0
  %1127 = vmatpush1.msra.mxu0 0.0
  %1128 = vmatprep.subr.mxu0 0.0
  %1129 = vmatpush1.msra.mxu0 0.0
  %1130 = vmatprep.subr.mxu0 0.0
  %1131 = vmatpush1.msra.mxu0 0.0
  %1132 = vmatprep.subr.mxu0 0.0
  %1133 = vmatpush1.msra.mxu0 0.0
  %1134 = vmatprep.subr.mxu0 0.0
  %1135 = vmatpush1.msra.mxu0 0.0
  %1136 = vmatprep.subr.mxu0 0.0
  %1137 = vmatpush1.msra.mxu0 0.0
  %1138 = vmatprep.subr.mxu0 0.0
  %1139 = vmatpush1.msra.mxu0 0.0
  %1140 = vmatprep.subr.mxu0 0.0
  %1141 = vmatpush1.msra.mxu0 0.0
  %1142 = vmatprep.subr.mxu0 0.0
  %1143 = vmatpush1.msra.mxu0 0.0
  %1144 = vmatprep.subr.mxu0 0.0
  %1145 = vmatpush1.msra.mxu0 0.0
  %1146 = vmatprep.subr.mxu0 0.0
  %1147 = vmatpush1.msra.mxu0 0.0
  %1148 = vmatprep.subr.mxu0 0.0
  %1149 = vmatpush1.msra.mxu0 0.0
  %1150 = vmatprep.subr.mxu0 0.0
  %1151 = vmatpush1.msra.mxu0 0.0
  %1152 = vmatprep.subr.mxu0 0.0
  %1153 = vmatpush1.msra.mxu0 0.0
  %1154 = vmatprep.subr.mxu0 0.0
  %1155 = vmatpush1.msra.mxu0 0.0
  %1156 = vmatprep.subr.mxu0 0.0
  %1157 = vmatpush1.msra.mxu0 0.0
  %1158 = vmatprep.subr.mxu0 0.0
  %1159 = vmatpush1.msra.mxu0 0.0
  %1160 = vmatprep.subr.mxu0 0.0
  %1161 = vmatpush1.msra.mxu0 0.0
  %1162 = vmatprep.subr.mxu0 0.0
  %1163 = vmatpush1.msra.mxu0 0.0
  %1164 = vmatprep.subr.mxu0 0.0
  %1165 = vmatpush1.msra.mxu0 0.0
  %1166 = vmatprep.subr.mxu0 0.0
  %1167 = vmatpush1.msra.mxu0 0.0
  %1168 = vmatprep.subr.mxu0 0.0
  %1169 = vmatpush1.msra.mxu0 0.0
  %1170 = vmatprep.subr.mxu0 0.0
  %1171 = vmatpush1.msra.mxu0 0.0
  %1172 = vmatprep.subr.mxu0 0.0
  %1173 = vmatpush1.msra.mxu0 0.0
  %1174 = vmatprep.subr.mxu0 0.0
  %1175 = vmatpush1.msra.mxu0 0.0
  %1176 = vmatprep.mubr.f32.mxu0 0.0
  %1177 = vmatmul.mubr.f32.gmra.mrb[0].mxu0 %v267
  %v1178 = vpop.f32.mrb[0].mxu0
  %v1179 = vadd.f32 0.0, %v1178
  %v1180 = vpop.f32.mrb[0].mxu0
  %1181 = vmatprep.mubr.f32.mxu0 0.0
  %1182 = vmatmul.mubr.f32.gmra.mrb[0].mxu0 %v270
  %v1183 = vpop.f32.mrb[0].mxu0
  %v1184 = vadd.f32 0.0, %v1183
  %v1185 = vpop.f32.mrb[0].mxu0
  %1186 = vdwg.mxu0
  %v1187 = vpack.c.bf16 %v786, %v785
  %v1188 = vpack.c.bf16 %v1109, %v1104
  %v1189 = vpack.c.bf16 %v1184, %v1179
  %s1190 = scalar_lea.vmem %s7, 192
  %v1191 = vld [vmem:[%s1190] sm:$0xf]
  %v1192 = vld [vmem:[%s1190 + $0x4] sm:$0xf]
  %v1193 = vld [vmem:[%s1190 + $0x8] sm:$0xf]
  %v1194 = vld [vmem:[%s1190 + $0xc] sm:$0xf]
  %v1195 = vld [vmem:[%s1190 + $0x10] sm:$0xf]
  %v1196 = vld [vmem:[%s1190 + $0x14] sm:$0xf]
  %v1197 = vld [vmem:[%s1190 + $0x18] sm:$0xf]
  %v1198 = vld [vmem:[%s1190 + $0x1c] sm:$0xf]
  %v1199 = vld [vmem:[%s1190 + $0x20] sm:$0xf]
  %v1200 = vld [vmem:[%s1190 + $0x24] sm:$0xf]
  %v1201 = vld [vmem:[%s1190 + $0x28] sm:$0xf]
  %v1202 = vld [vmem:[%s1190 + $0x2c] sm:$0xf]
  %v1203 = vld [vmem:[%s1190 + $0x30] sm:$0xf]
  %v1204 = vld [vmem:[%s1190 + $0x34] sm:$0xf]
  %v1205 = vld [vmem:[%s1190 + $0x38] sm:$0xf]
  %v1206 = vld [vmem:[%s1190 + $0x3c] sm:$0xf]
  %v1207 = vld [vmem:[%s1190 + $0x40] sm:$0xf]
  %v1208 = vld [vmem:[%s1190 + $0x44] sm:$0xf]
  %v1209 = vld [vmem:[%s1190 + $0x48] sm:$0xf]
  %v1210 = vld [vmem:[%s1190 + $0x4c] sm:$0xf]
  %v1211 = vld [vmem:[%s1190 + $0x50] sm:$0xf]
  %v1212 = vld [vmem:[%s1190 + $0x54] sm:$0xf]
  %v1213 = vld [vmem:[%s1190 + $0x58] sm:$0xf]
  %v1214 = vld [vmem:[%s1190 + $0x5c] sm:$0xf]
  %v1215 = vld [vmem:[%s1190 + $0x60] sm:$0xf]
  %v1216 = vld [vmem:[%s1190 + $0x64] sm:$0xf]
  %v1217 = vld [vmem:[%s1190 + $0x68] sm:$0xf]
  %v1218 = vld [vmem:[%s1190 + $0x6c] sm:$0xf]
  %v1219 = vld [vmem:[%s1190 + $0x70] sm:$0xf]
  %v1220 = vld [vmem:[%s1190 + $0x74] sm:$0xf]
  %v1221 = vld [vmem:[%s1190 + $0x78] sm:$0xf]
  %v1222 = vld [vmem:[%s1190 + $0x7c] sm:$0xf]
  %v1223 = vld [vmem:[%s1190 + $0x80] sm:$0xf]
  %v1224 = vld [vmem:[%s1190 + $0x84] sm:$0xf]
  %v1225 = vld [vmem:[%s1190 + $0x88] sm:$0xf]
  %v1226 = vld [vmem:[%s1190 + $0x8c] sm:$0xf]
  %v1227 = vld [vmem:[%s1190 + $0x90] sm:$0xf]
  %v1228 = vld [vmem:[%s1190 + $0x94] sm:$0xf]
  %v1229 = vld [vmem:[%s1190 + $0x98] sm:$0xf]
  %v1230 = vld [vmem:[%s1190 + $0x9c] sm:$0xf]
  %v1231 = vld [vmem:[%s1190 + $0xa0] sm:$0xf]
  %v1232 = vld [vmem:[%s1190 + $0xa4] sm:$0xf]
  %v1233 = vld [vmem:[%s1190 + $0xa8] sm:$0xf]
  %v1234 = vld [vmem:[%s1190 + $0xac] sm:$0xf]
  %v1235 = vld [vmem:[%s1190 + $0xb0] sm:$0xf]
  %v1236 = vld [vmem:[%s1190 + $0xb4] sm:$0xf]
  %v1237 = vld [vmem:[%s1190 + $0xb8] sm:$0xf]
  %v1238 = vld [vmem:[%s1190 + $0xbc] sm:$0xf]
  %v1239 = vlaneseq
  %v1240 = vshrl.u32 %v1239, 7
  %v1241 = vsub.s32 0, %v1240
  %v1242 = vrot.slane %v46, %v1241
  %v1291 = vunpack.c.l.b16 %v1191
  %v1292 = vunpack.c.l.b16 %v1192
  %v1293 = vunpack.c.l.b16 %v1193
  %v1294 = vunpack.c.l.b16 %v1194
  %v1295 = vunpack.c.l.b16 %v1195
  %v1296 = vunpack.c.l.b16 %v1196
  %v1297 = vunpack.c.l.b16 %v1197
  %v1298 = vunpack.c.l.b16 %v1198
  %v1299 = vunpack.c.l.b16 %v1199
  %v1300 = vunpack.c.l.b16 %v1200
  %v1301 = vunpack.c.l.b16 %v1201
  %v1302 = vunpack.c.l.b16 %v1202
  %v1303 = vunpack.c.l.b16 %v1203
  %v1304 = vunpack.c.l.b16 %v1204
  %v1305 = vunpack.c.l.b16 %v1205
  %v1306 = vunpack.c.l.b16 %v1206
  %v1307 = vunpack.c.l.b16 %v1207
  %v1308 = vunpack.c.l.b16 %v1208
  %v1309 = vunpack.c.l.b16 %v1209
  %v1310 = vunpack.c.l.b16 %v1210
  %v1311 = vunpack.c.l.b16 %v1211
  %v1312 = vunpack.c.l.b16 %v1212
  %v1313 = vunpack.c.l.b16 %v1213
  %v1314 = vunpack.c.l.b16 %v1214
  %v1315 = vunpack.c.l.b16 %v1215
  %v1316 = vunpack.c.l.b16 %v1216
  %v1317 = vunpack.c.l.b16 %v1217
  %v1318 = vunpack.c.l.b16 %v1218
  %v1319 = vunpack.c.l.b16 %v1219
  %v1320 = vunpack.c.l.b16 %v1220
  %v1321 = vunpack.c.l.b16 %v1221
  %v1322 = vunpack.c.l.b16 %v1222
  %v1323 = vunpack.c.l.b16 %v1223
  %v1324 = vunpack.c.l.b16 %v1224
  %v1325 = vunpack.c.l.b16 %v1225
  %v1326 = vunpack.c.l.b16 %v1226
  %v1327 = vunpack.c.l.b16 %v1227
  %v1328 = vunpack.c.l.b16 %v1228
  %v1329 = vunpack.c.l.b16 %v1229
  %v1330 = vunpack.c.l.b16 %v1230
  %v1331 = vunpack.c.l.b16 %v1231
  %v1332 = vunpack.c.l.b16 %v1232
  %v1333 = vunpack.c.l.b16 %v1233
  %v1334 = vunpack.c.l.b16 %v1234
  %v1335 = vunpack.c.l.b16 %v1235
  %v1336 = vunpack.c.l.b16 %v1236
  %v1337 = vunpack.c.l.b16 %v1237
  %v1338 = vunpack.c.l.b16 %v1238
  %v1339 = vpack.c.b16 %v1292, %v1291
  %v1340 = vpack.c.b16 %v1294, %v1293
  %v1341 = vpack.c.b16 %v1296, %v1295
  %v1342 = vpack.c.b16 %v1298, %v1297
  %v1343 = vpack.c.b16 %v1300, %v1299
  %v1344 = vpack.c.b16 %v1302, %v1301
  %v1345 = vpack.c.b16 %v1304, %v1303
  %v1346 = vpack.c.b16 %v1306, %v1305
  %v1347 = vpack.c.b16 %v1308, %v1307
  %v1348 = vpack.c.b16 %v1310, %v1309
  %v1349 = vpack.c.b16 %v1312, %v1311
  %v1350 = vpack.c.b16 %v1314, %v1313
  %v1351 = vpack.c.b16 %v1316, %v1315
  %v1352 = vpack.c.b16 %v1318, %v1317
  %v1353 = vpack.c.b16 %v1320, %v1319
  %v1354 = vpack.c.b16 %v1322, %v1321
  %v1355 = vpack.c.b16 %v1324, %v1323
  %v1356 = vpack.c.b16 %v1326, %v1325
  %v1357 = vpack.c.b16 %v1328, %v1327
  %v1358 = vpack.c.b16 %v1330, %v1329
  %v1359 = vpack.c.b16 %v1332, %v1331
  %v1360 = vpack.c.b16 %v1334, %v1333
  %v1361 = vpack.c.b16 %v1336, %v1335
  %v1362 = vpack.c.b16 %v1338, %v1337
  %1387 = vmatprep.subr.bf16.mxu0 0
  %1388 = vmatpush1.bf16.msra.mxu0 %v1339
  %1389 = vmatprep.subr.bf16.mxu0 0
  %1390 = vmatpush1.bf16.msra.mxu0 %v1340
  %1391 = vmatprep.subr.bf16.mxu0 0
  %1392 = vmatpush1.bf16.msra.mxu0 %v1341
  %1393 = vmatprep.subr.bf16.mxu0 0
  %1394 = vmatpush1.bf16.msra.mxu0 %v1342
  %1395 = vmatprep.subr.bf16.mxu0 0
  %1396 = vmatpush1.bf16.msra.mxu0 %v1343
  %1397 = vmatprep.subr.bf16.mxu0 0
  %1398 = vmatpush1.bf16.msra.mxu0 %v1344
  %1399 = vmatprep.subr.bf16.mxu0 0
  %1400 = vmatpush1.bf16.msra.mxu0 %v1345
  %1401 = vmatprep.subr.bf16.mxu0 0
  %1402 = vmatpush1.bf16.msra.mxu0 %v1346
  %1403 = vmatprep.subr.bf16.mxu0 0
  %1404 = vmatpush1.bf16.msra.mxu0 %v1347
  %1405 = vmatprep.subr.bf16.mxu0 0
  %1406 = vmatpush1.bf16.msra.mxu0 %v1348
  %1407 = vmatprep.subr.bf16.mxu0 0
  %1408 = vmatpush1.bf16.msra.mxu0 %v1349
  %1409 = vmatprep.subr.bf16.mxu0 0
  %1410 = vmatpush1.bf16.msra.mxu0 %v1350
  %1411 = vmatprep.subr.bf16.mxu0 0
  %1412 = vmatpush1.bf16.msra.mxu0 %v1351
  %1413 = vmatprep.subr.bf16.mxu0 0
  %1414 = vmatpush1.bf16.msra.mxu0 %v1352
  %1415 = vmatprep.subr.bf16.mxu0 0
  %1416 = vmatpush1.bf16.msra.mxu0 %v1353
  %1417 = vmatprep.subr.bf16.mxu0 0
  %1418 = vmatpush1.bf16.msra.mxu0 %v1354
  %1419 = vmatprep.mubr.bf16.mxu0 %v1188
  %1420 = vmatmul.mubr.bf16.gmra.mrb[0].mxu0 %v1187
  %v1421 = vpop.f32.mrb[0].mxu0
  %v1422 = vadd.f32 %v1242, %v1421
  %v1423 = vpop.f32.mrb[0].mxu0
  %v1424 = vpop.f32.mrb[0].mxu0
  %v1425 = vadd.f32 %v1242, %v1424
  %v1426 = vpop.f32.mrb[0].mxu0
  %1427 = vdwg.mxu0
  %1428 = vmatprep.subr.bf16.mxu0 0
  %1429 = vmatpush1.bf16.msra.mxu0 %v1355
  %1430 = vmatprep.subr.bf16.mxu0 0
  %1431 = vmatpush1.bf16.msra.mxu0 %v1356
  %1432 = vmatprep.subr.bf16.mxu0 0
  %1433 = vmatpush1.bf16.msra.mxu0 %v1357
  %1434 = vmatprep.subr.bf16.mxu0 0
  %1435 = vmatpush1.bf16.msra.mxu0 %v1358
  %1436 = vmatprep.subr.bf16.mxu0 0
  %1437 = vmatpush1.bf16.msra.mxu0 %v1359
  %1438 = vmatprep.subr.bf16.mxu0 0
  %1439 = vmatpush1.bf16.msra.mxu0 %v1360
  %1440 = vmatprep.subr.bf16.mxu0 0
  %1441 = vmatpush1.bf16.msra.mxu0 %v1361
  %1442 = vmatprep.subr.bf16.mxu0 0
  %1443 = vmatpush1.bf16.msra.mxu0 %v1362
  %1444 = vmatprep.subr.bf16.mxu0 0
  %1445 = vmatpush1.bf16.msra.mxu0 0
  %1446 = vmatprep.subr.bf16.mxu0 0
  %1447 = vmatpush1.bf16.msra.mxu0 0
  %1448 = vmatprep.subr.bf16.mxu0 0
  %1449 = vmatpush1.bf16.msra.mxu0 0
  %1450 = vmatprep.subr.bf16.mxu0 0
  %1451 = vmatpush1.bf16.msra.mxu0 0
  %1452 = vmatprep.subr.bf16.mxu0 0
  %1453 = vmatpush1.bf16.msra.mxu0 0
  %1454 = vmatprep.subr.bf16.mxu0 0
  %1455 = vmatpush1.bf16.msra.mxu0 0
  %1456 = vmatprep.subr.bf16.mxu0 0
  %1457 = vmatpush1.bf16.msra.mxu0 0
  %1458 = vmatprep.subr.bf16.mxu0 0
  %1459 = vmatpush1.bf16.msra.mxu0 0
  %1460 = vmatprep.mubr.bf16.mxu0 0
  %1461 = vmatmul.mubr.bf16.gmra.mrb[0].mxu0 %v1189
  %v1462 = vpop.f32.mrb[0].mxu0
  %v1463 = vadd.f32 %v1422, %v1462
  %v1464 = vpop.f32.mrb[0].mxu0
  %v1465 = vpop.f32.mrb[0].mxu0
  %v1466 = vadd.f32 %v1425, %v1465
  %v1467 = vpop.f32.mrb[0].mxu0
  %1468 = vdwg.mxu0
  %v1469 = vadd.f32 %v785, %v1463
  %v1470 = vadd.f32 %v786, %v1466
  %v1471 = vmax.f32 %v1469, 0.0
  %v1472 = vmax.f32 %v1470, 0.0
  %v1473 = vpack.c.bf16 %v1472, %v1471
  %s1474 = scalar_lea.vmem %s8, 64
  %v1475 = vld [vmem:[%s1474] sm:$0xf]
  %v1476 = vld [vmem:[%s1474 + $0x4] sm:$0xf]
  %v1477 = vld [vmem:[%s1474 + $0x8] sm:$0xf]
  %v1478 = vld [vmem:[%s1474 + $0xc] sm:$0xf]
  %v1479 = vld [vmem:[%s1474 + $0x10] sm:$0xf]
  %v1480 = vld [vmem:[%s1474 + $0x14] sm:$0xf]
  %v1481 = vld [vmem:[%s1474 + $0x18] sm:$0xf]
  %v1482 = vld [vmem:[%s1474 + $0x1c] sm:$0xf]
  %v1483 = vld [vmem:[%s1474 + $0x20] sm:$0xf]
  %v1484 = vld [vmem:[%s1474 + $0x24] sm:$0xf]
  %v1485 = vld [vmem:[%s1474 + $0x28] sm:$0xf]
  %v1486 = vld [vmem:[%s1474 + $0x2c] sm:$0xf]
  %v1487 = vld [vmem:[%s1474 + $0x30] sm:$0xf]
  %v1488 = vld [vmem:[%s1474 + $0x34] sm:$0xf]
  %v1489 = vld [vmem:[%s1474 + $0x38] sm:$0xf]
  %v1490 = vld [vmem:[%s1474 + $0x3c] sm:$0xf]
  %v1491 = vlaneseq
  %v1492 = vshrl.u32 %v1491, 7
  %v1493 = vsub.s32 1, %v1492
  %v1494 = vrot.slane %v46, %v1493
  %v1511 = vunpack.c.l.b16 %v1475
  %v1512 = vunpack.c.l.b16 %v1476
  %v1513 = vunpack.c.l.b16 %v1477
  %v1514 = vunpack.c.l.b16 %v1478
  %v1515 = vunpack.c.l.b16 %v1479
  %v1516 = vunpack.c.l.b16 %v1480
  %v1517 = vunpack.c.l.b16 %v1481
  %v1518 = vunpack.c.l.b16 %v1482
  %v1519 = vunpack.c.l.b16 %v1483
  %v1520 = vunpack.c.l.b16 %v1484
  %v1521 = vunpack.c.l.b16 %v1485
  %v1522 = vunpack.c.l.b16 %v1486
  %v1523 = vunpack.c.l.b16 %v1487
  %v1524 = vunpack.c.l.b16 %v1488
  %v1525 = vunpack.c.l.b16 %v1489
  %v1526 = vunpack.c.l.b16 %v1490
  %v1527 = vpack.c.b16 %v1512, %v1511
  %v1528 = vpack.c.b16 %v1514, %v1513
  %v1529 = vpack.c.b16 %v1516, %v1515
  %v1530 = vpack.c.b16 %v1518, %v1517
  %v1531 = vpack.c.b16 %v1520, %v1519
  %v1532 = vpack.c.b16 %v1522, %v1521
  %v1533 = vpack.c.b16 %v1524, %v1523
  %v1534 = vpack.c.b16 %v1526, %v1525
  %1543 = vmatprep.subr.bf16.mxu0 0
  %1544 = vmatpush1.bf16.msra.mxu0 %v1527
  %1545 = vmatprep.subr.bf16.mxu0 0
  %1546 = vmatpush1.bf16.msra.mxu0 %v1528
  %1547 = vmatprep.subr.bf16.mxu0 0
  %1548 = vmatpush1.bf16.msra.mxu0 %v1529
  %1549 = vmatprep.subr.bf16.mxu0 0
  %1550 = vmatpush1.bf16.msra.mxu0 %v1530
  %1551 = vmatprep.subr.bf16.mxu0 0
  %1552 = vmatpush1.bf16.msra.mxu0 %v1531
  %1553 = vmatprep.subr.bf16.mxu0 0
  %1554 = vmatpush1.bf16.msra.mxu0 %v1532
  %1555 = vmatprep.subr.bf16.mxu0 0
  %1556 = vmatpush1.bf16.msra.mxu0 %v1533
  %1557 = vmatprep.subr.bf16.mxu0 0
  %1558 = vmatpush1.bf16.msra.mxu0 %v1534
  %1559 = vmatprep.subr.bf16.mxu0 0
  %1560 = vmatpush1.bf16.msra.mxu0 0
  %1561 = vmatprep.subr.bf16.mxu0 0
  %1562 = vmatpush1.bf16.msra.mxu0 0
  %1563 = vmatprep.subr.bf16.mxu0 0
  %1564 = vmatpush1.bf16.msra.mxu0 0
  %1565 = vmatprep.subr.bf16.mxu0 0
  %1566 = vmatpush1.bf16.msra.mxu0 0
  %1567 = vmatprep.subr.bf16.mxu0 0
  %1568 = vmatpush1.bf16.msra.mxu0 0
  %1569 = vmatprep.subr.bf16.mxu0 0
  %1570 = vmatpush1.bf16.msra.mxu0 0
  %1571 = vmatprep.subr.bf16.mxu0 0
  %1572 = vmatpush1.bf16.msra.mxu0 0
  %1573 = vmatprep.subr.bf16.mxu0 0
  %1574 = vmatpush1.bf16.msra.mxu0 0
  %1575 = vmatprep.mubr.bf16.mxu0 0
  %1576 = vmatmul.mubr.bf16.gmra.mrb[0].mxu0 %v1473
  %v1577 = vpop.f32.mrb[0].mxu0
  %v1578 = vadd.f32 %v1494, %v1577
  %v1579 = vpop.f32.mrb[0].mxu0
  %v1580 = vpop.f32.mrb[0].mxu0
  %v1581 = vadd.f32 %v1494, %v1580
  %v1582 = vpop.f32.mrb[0].mxu0
  %1583 = vdwg.mxu0
  %v1584 = vmax.f32 %v1578, 0.0
  %v1585 = vmax.f32 %v1581, 0.0
  %1586 = vadd.xlane.f32.xlu0 %v1584
  %v1587 = vpop.xlane.xlu0 %1586
  %1588 = vadd.xlane.f32.xlu0 %v1585
  %v1589 = vpop.xlane.xlu0 %1588
  %v1590 = vmul.f32 %v1587, %v748
  %v1591 = vmul.f32 %v1589, %v748
  %v1592 = vmul.f32 %v1584, %v1584
  %v1593 = vmul.f32 %v1585, %v1585
  %1594 = vadd.xlane.f32.xlu0 %v1592
  %v1595 = vpop.xlane.xlu0 %1594
  %1596 = vadd.xlane.f32.xlu0 %v1593
  %v1597 = vpop.xlane.xlu0 %1596
  %v1598 = vmul.f32 %v1595, %v748
  %v1599 = vmul.f32 %v1597, %v748
  %v1600 = vmul.f32 %v1590, %v1590
  %v1601 = vmul.f32 %v1591, %v1591
  %v1602 = vsub.f32 %v1598, %v1600
  %v1603 = vsub.f32 %v1599, %v1601
  %v1604 = vmax.f32 %v1602, 0.0
  %v1605 = vmax.f32 %v1603, 0.0
  %v1606 = vsub.f32 %v1584, %v1590
  %v1607 = vsub.f32 %v1585, %v1591
  %v1608 = vadd.f32 %v1604, 1e-05
  %v1609 = vadd.f32 %v1605, 1e-05
  %v1610 = vrsqrt.pop %v1608
  %v1611 = vrsqrt.pop %v1609
  %v1612 = vmul.f32 %v1606, %v1610
  %v1613 = vmul.f32 %v1607, %v1611
  %v1614 = vlaneseq
  %v1615 = vshrl.u32 %v1614, 7
  %v1616 = vsub.s32 2, %v1615
  %v1617 = vrot.slane %v46, %v1616
  %v1618 = vmul.f32 %v1612, %v1617
  %v1619 = vmul.f32 %v1613, %v1617
  %v1620 = vlaneseq
  %v1621 = vshrl.u32 %v1620, 7
  %v1622 = vsub.s32 3, %v1621
  %v1623 = vrot.slane %v46, %v1622
  %v1624 = vadd.f32 %v1618, %v1623
  %v1625 = vadd.f32 %v1619, %v1623
  %v1626 = vadd.f32 %v1471, %v1624
  %v1627 = vadd.f32 %v1472, %v1625
  %v1628 = vpack.c.bf16 %v1627, %v1626
  %v1629 = vld [vmem:[%s11] sm:$0xf]
  %v1630 = vld [vmem:[%s11 + $0x4] sm:$0xf]
  %v1631 = vld [vmem:[%s11 + $0x8] sm:$0xf]
  %v1632 = vld [vmem:[%s11 + $0xc] sm:$0xf]
  %v1633 = vld [vmem:[%s11 + $0x10] sm:$0xf]
  %v1634 = vld [vmem:[%s11 + $0x14] sm:$0xf]
  %v1635 = vld [vmem:[%s11 + $0x18] sm:$0xf]
  %v1636 = vld [vmem:[%s11 + $0x1c] sm:$0xf]
  %v1637 = vld [vmem:[%s11 + $0x20] sm:$0xf]
  %v1638 = vld [vmem:[%s11 + $0x24] sm:$0xf]
  %v1639 = vld [vmem:[%s11 + $0x28] sm:$0xf]
  %v1640 = vld [vmem:[%s11 + $0x2c] sm:$0xf]
  %v1641 = vld [vmem:[%s11 + $0x30] sm:$0xf]
  %v1642 = vld [vmem:[%s11 + $0x34] sm:$0xf]
  %v1643 = vld [vmem:[%s11 + $0x38] sm:$0xf]
  %v1644 = vld [vmem:[%s11 + $0x3c] sm:$0xf]
  %v1645 = vld [vmem:[%s4] sm:$0xff]
  %v1646 = vld [vmem:[%s4 + $0x8] sm:$0xff]
  %1648 = vset.pattern.permute.xlu0 0
  %1649 = vperm.xlu0 %1648, %v1645
  %v1650 = vpop.permute.xlu0 %1649
  %1653 = vset.pattern.permute.xlu0 0
  %1654 = vperm.xlu0 %1653, %v1646
  %v1655 = vpop.permute.xlu0 %1654
  %v1673 = vunpack.c.l.b16 %v1629
  %v1674 = vunpack.c.l.b16 %v1630
  %v1675 = vunpack.c.l.b16 %v1631
  %v1676 = vunpack.c.l.b16 %v1632
  %v1677 = vunpack.c.l.b16 %v1633
  %v1678 = vunpack.c.l.b16 %v1634
  %v1679 = vunpack.c.l.b16 %v1635
  %v1680 = vunpack.c.l.b16 %v1636
  %v1681 = vunpack.c.l.b16 %v1637
  %v1682 = vunpack.c.l.b16 %v1638
  %v1683 = vunpack.c.l.b16 %v1639
  %v1684 = vunpack.c.l.b16 %v1640
  %v1685 = vunpack.c.l.b16 %v1641
  %v1686 = vunpack.c.l.b16 %v1642
  %v1687 = vunpack.c.l.b16 %v1643
  %v1688 = vunpack.c.l.b16 %v1644
  %v1689 = vpack.c.b16 %v1674, %v1673
  %v1690 = vpack.c.b16 %v1676, %v1675
  %v1691 = vpack.c.b16 %v1678, %v1677
  %v1692 = vpack.c.b16 %v1680, %v1679
  %v1693 = vpack.c.b16 %v1682, %v1681
  %v1694 = vpack.c.b16 %v1684, %v1683
  %v1695 = vpack.c.b16 %v1686, %v1685
  %v1696 = vpack.c.b16 %v1688, %v1687
  %1705 = vmatprep.subr.bf16.mxu0 0
  %1706 = vmatpush1.bf16.msra.mxu0 %v1689
  %1707 = vmatprep.subr.bf16.mxu0 0
  %1708 = vmatpush1.bf16.msra.mxu0 %v1690
  %1709 = vmatprep.subr.bf16.mxu0 0
  %1710 = vmatpush1.bf16.msra.mxu0 %v1691
  %1711 = vmatprep.subr.bf16.mxu0 0
  %1712 = vmatpush1.bf16.msra.mxu0 %v1692
  %1713 = vmatprep.subr.bf16.mxu0 0
  %1714 = vmatpush1.bf16.msra.mxu0 %v1693
  %1715 = vmatprep.subr.bf16.mxu0 0
  %1716 = vmatpush1.bf16.msra.mxu0 %v1694
  %1717 = vmatprep.subr.bf16.mxu0 0
  %1718 = vmatpush1.bf16.msra.mxu0 %v1695
  %1719 = vmatprep.subr.bf16.mxu0 0
  %1720 = vmatpush1.bf16.msra.mxu0 %v1696
  %1721 = vmatprep.subr.bf16.mxu0 0
  %1722 = vmatpush1.bf16.msra.mxu0 0
  %1723 = vmatprep.subr.bf16.mxu0 0
  %1724 = vmatpush1.bf16.msra.mxu0 0
  %1725 = vmatprep.subr.bf16.mxu0 0
  %1726 = vmatpush1.bf16.msra.mxu0 0
  %1727 = vmatprep.subr.bf16.mxu0 0
  %1728 = vmatpush1.bf16.msra.mxu0 0
  %1729 = vmatprep.subr.bf16.mxu0 0
  %1730 = vmatpush1.bf16.msra.mxu0 0
  %1731 = vmatprep.subr.bf16.mxu0 0
  %1732 = vmatpush1.bf16.msra.mxu0 0
  %1733 = vmatprep.subr.bf16.mxu0 0
  %1734 = vmatpush1.bf16.msra.mxu0 0
  %1735 = vmatprep.subr.bf16.mxu0 0
  %1736 = vmatpush1.bf16.msra.mxu0 0
  %1737 = vmatprep.mubr.bf16.mxu0 0
  %1738 = vmatmul.mubr.bf16.gmra.mrb[0].mxu0 %v1628
  %v1739 = vpop.f32.mrb[0].mxu0
  %v1740 = vadd.f32 %v1650, %v1739
  %v1741 = vpop.f32.mrb[0].mxu0
  %v1742 = vpop.f32.mrb[0].mxu0
  %v1743 = vadd.f32 %v1655, %v1742
  %v1744 = vpop.f32.mrb[0].mxu0
  %1745 = vdwg.mxu0
  %1746 = vst [vmem:[%s13] sm:$0xff] %v1740
  %1747 = vst [vmem:[%s13 + $0x8] sm:$0xff] %v1743
  // Predicated region
  $region54: #{network_forward.1} parent=0 // pred_check
    _
  $region55: #{network_forward.1} parent=0 // pred_check_branch
    %1749 = sbr.rel (0) target = $region57
  $region56: #{network_forward.1} parent=0 // pred_region
    _
  $region57: #{network_forward.1} parent=0 // pred_fallthru
    _
  // Predicated region
  $region58: #{network_forward.1} parent=0 // pred_check
    _
  $region59: #{network_forward.1} parent=0 // pred_check_branch
    %1751 = sbr.rel (0) target = $region61
  $region60: #{network_forward.1} parent=0 // pred_region
    _
  $region61: #{network_forward.1} parent=0 // pred_fallthru
    _

</llo_original>
